<compile_context>
chip_gen: v7x
topology: tpu7x:2x2x1
jax: 0.10.0
libtpu: 0.0.40
codegen_flags: <defaults>
</compile_context>

<pallas_src>
import numpy as np
import jax
import jax.numpy as jnp
from jax import lax
from jax.experimental import pallas as pl
from jax.experimental.pallas import tpu as pltpu

DIM_FEAT = 128      # MoCo feature dim (num_classes=128)
DIM_MLP = 32        # dim_mlp (encoder_q.fc.weight.shape[1]) -- small synthetic value
K_QUEUE = 16384     # queue size (indices sampled from range(0, 16384))
NUM_NEG = 64        # num = 64 sampled negatives
TEMP = 0.07         # self.T (unused in forward, kept for fidelity)

# per-pipeline-buffer budget for the streamed image tile; 2 buffers => ~12 MiB,
# which fits the v5e (8-12 MiB) and v7x (<~24-32 MiB total) guidance and is
# already deep into the >=85%-of-roofline regime on v6e.
_X_BUFFER_BUDGET = 6 * 1024 * 1024


def _pick_pixel_tile(hw, c, itemsize, budget=_X_BUFFER_BUDGET):
    """Largest 128-multiple tile dividing H*W that fits the VMEM budget."""
    if hw < 128 or hw % 128 != 0:
        # TODO(synk): odd H*W falls back to a single full-image tile.
        return hw
    max_tile = max(128, (budget // (c * itemsize)) // 128 * 128)
    best, t = 128, 128
    limit = min(hw, max_tile)
    while t <= limit:
        if hw % t == 0:
            best = t
        t += 128
    return best


def _folded_width(tile):
    w = tile
    while w % 256 == 0:
        w //= 2
    return w


def _lane_fold(v):
    # Lane-aligned halving: every slice boundary is a multiple of 128, so the
    # adds are plain VPU ops on whole vregs (no relayout, no XLU), and the
    # number of statements is log2-bounded regardless of the tile size.
    w = v.shape[1]
    while w % 256 == 0:
        w //= 2
        v = v[:, :w] + v[:, w:2 * w]
    return v


# ---------------------------------------------------------------------------
# Phase 1: stem + GAP + fc head + normalize + Mahalanobis mean  -> ans (B,1,128)
# grid = (B, n_pixel_tiles): batch axis "parallel", pixel-tile axis serial.
# gap_acc only persists across the (serial) tile axis of one image, so the
# parallel batch split is safe.
# ---------------------------------------------------------------------------
def _encode_kernel(x_ref, wct_ref, bcc_ref, w1_ref, b1_ref, w2_ref, b2_ref,
                   cols_ref, invd_ref, ans_ref, gap_acc):
    t = pl.program_id(1)
    nt = pl.num_programs(1)

    @pl.when(t == 0)
    def _defensive_out_init():
        # resident output block: make sure it can never flush uninitialized VMEM
        ans_ref[...] = jnp.zeros_like(ans_ref)

    # --- 1x1-conv stem (features on sublanes, pixels lane-dense) + ReLU ---
    xb = x_ref[0]                                                   # (C, TILE)
    h = jnp.dot(wct_ref[...], xb, preferred_element_type=jnp.float32)
    h = jnp.maximum(h + bcc_ref[...], 0.0)                          # (DIM_MLP, TILE) f32

    # --- GAP partial sum for this tile: pure-VPU lane folds ---
    partial = _lane_fold(h)                                         # (DIM_MLP, W_fold)

    @pl.when(t == 0)
    def _first_tile():
        gap_acc[...] = partial          # direct write, no zero-init round trip

    @pl.when(t != 0)
    def _accumulate():
        gap_acc[...] += partial

    @pl.when(t == nt - 1)
    def _finish_image():
        # single cross-lane (XLU) reduce per image; 1/(H*W) is folded into w1.
        gap_col = jnp.sum(gap_acc[...], axis=1, keepdims=True)      # (DIM_MLP, 1)
        p = jnp.transpose(gap_col)                                  # (1, DIM_MLP)

        # ---- MLP fc head + F.normalize(dim=1) ----
        z = jnp.dot(p, w1_ref[...], preferred_element_type=jnp.float32) + b1_ref[...]
        z = jnp.maximum(z, 0.0)
        f = jnp.dot(z, w2_ref[...], preferred_element_type=jnp.float32) + b2_ref[...]
        nrm2 = jnp.sum(f * f, axis=1, keepdims=True)                # (1, 1)
        q = f * lax.rsqrt(jnp.maximum(nrm2, 1e-24))                 # (1, DIM_FEAT)

        # ---- mean Mahalanobis distance vs 64 sampled queue rows (direct) ----
        d = q - cols_ref[...]                                       # (NUM_NEG, DIM_FEAT)
        ad = jnp.dot(d, invd_ref[...], preferred_element_type=jnp.float32)
        quad = jnp.sum(ad * d, axis=1, keepdims=True)               # (NUM_NEG, 1)
        dist = jnp.sqrt(jnp.maximum(quad, 0.0))
        ansb = jnp.sum(dist, axis=0, keepdims=True) * (1.0 / NUM_NEG)   # (1, 1)

        ans_ref[...] = jnp.broadcast_to(ansb, ans_ref.shape)        # lane-dense write


# ---------------------------------------------------------------------------
# Phase 2: one-shot lexicographic-rank mask + output[:,2]/[:,3] fix-up.
# ---------------------------------------------------------------------------
def _rank_fixup_kernel(ans_ref, out_in_ref, out_ref):
    B = out_in_ref.shape[0]
    ansM = ans_ref[...]                                             # (B, 128), lane-replicated
    ai = ansM[:, 0:1]                                               # (B, 1)
    aj = jnp.transpose(ansM)[0:1, :]                                # (1, B)
    ii = lax.broadcasted_iota(jnp.int32, (B, B), 0)
    jj = lax.broadcasted_iota(jnp.int32, (B, B), 1)
    # rank_i = #{j : (ans_j, j) <lex (ans_i, i)} == position of i in
    # sorted(my_list, key=(ans, i)); keep the positions of result[-64:-1].
    lexless = jnp.logical_or(aj < ai, jnp.logical_and(aj == ai, jj < ii))
    rank = jnp.sum(lexless.astype(jnp.int32), axis=1, keepdims=True)
    keep = jnp.logical_and(rank >= B - 64, rank <= B - 2)           # (B, 1)

    # for selected rows: if |out[i,2]|<1 or |out[i,3]|<1: out[i,2]=-5; out[i,3]=5
    outv = out_in_ref[...]                                          # (B, C_out)
    colid = lax.broadcasted_iota(jnp.int32, outv.shape, 1)
    is2 = colid == 2
    is3 = colid == 3
    v2 = jnp.sum(jnp.where(is2, jnp.abs(outv), 0.0), axis=1, keepdims=True)
    v3 = jnp.sum(jnp.where(is3, jnp.abs(outv), 0.0), axis=1, keepdims=True)
    cond = jnp.logical_and(keep, jnp.logical_or(v2 < 1.0, v3 < 1.0))
    y = jnp.where(jnp.logical_and(cond, is2), -5.0, outv)
    y = jnp.where(jnp.logical_and(cond, is3), 5.0, y)
    out_ref[...] = y


# ---------------------------------------------------------------------------
# Parameter / queue init (deterministic, mirrors MoCo.__init__ setup work)
# ---------------------------------------------------------------------------
def init_params(key, c_in=4):
    # TODO(synk): base_encoder is unspecified in the PyTorch module; a synthetic
    # 1x1-conv stem + GAP + [Linear,ReLU,Linear(128)] head stands in for it.
    ks = jax.random.split(key, 7)
    s = 0.1
    w_conv = s * jax.random.normal(ks[0], (c_in, DIM_MLP), jnp.float32)
    b_conv = s * jax.random.normal(ks[1], (1, DIM_MLP), jnp.float32)
    w1 = s * jax.random.normal(ks[2], (DIM_MLP, DIM_MLP), jnp.float32)
    b1 = s * jax.random.normal(ks[3], (1, DIM_MLP), jnp.float32)
    w2 = s * jax.random.normal(ks[4], (DIM_MLP, DIM_FEAT), jnp.float32)
    b2 = s * jax.random.normal(ks[5], (1, DIM_FEAT), jnp.float32)

    # queue stored ROW-major (K, D): row k <-> original queue column k, so the
    # per-forward gather touches 64 contiguous 512 B rows (no 8 MiB transpose).
    queue_rows = jax.random.normal(ks[6], (K_QUEUE, DIM_FEAT), jnp.float32)

    # __init__: D = numpy.cov(queue); invD = numpy.linalg.inv(D)  (setup-time)
    qn = np.asarray(queue_rows, dtype=np.float64)
    invd = np.linalg.inv(np.cov(qn, rowvar=False))
    invd = 0.5 * (invd + invd.T)          # symmetrize (inverse covariance is symmetric)

    return dict(
        w_conv_t=jnp.transpose(w_conv),   # (DIM_MLP, C)  -- stem weight, kernel layout
        b_conv_c=jnp.transpose(b_conv),   # (DIM_MLP, 1)
        w1=w1, b1=b1,                     # (DIM_MLP, DIM_MLP), (1, DIM_MLP)
        w2=w2, b2=b2,                     # (DIM_MLP, DIM_FEAT), (1, DIM_FEAT)
        queue_rows=queue_rows,            # (K_QUEUE, DIM_FEAT)
        invD=jnp.asarray(invd, jnp.float32),
    )


# ---------------------------------------------------------------------------
# Forward pass
# ---------------------------------------------------------------------------
def moco_forward(params, im_q, output, target, sample_key):
    del target  # unused by MoCo.forward, matching the PyTorch code
    B, C, H, W = im_q.shape
    HW = H * W
    itemsize = jnp.dtype(im_q.dtype).itemsize
    TILE = _pick_pixel_tile(HW, C, itemsize)
    n_tiles = HW // TILE
    w_fold = _folded_width(TILE)
    c_out = output.shape[1]

    # NCHW -> (B, C, H*W): pure reshape (no transpose); pixels stay lane-dense.
    x_l = im_q.reshape(B, C, HW)
    # stem weight matches the image dtype (bf16 input path halves HBM traffic).
    wct = params["w_conv_t"].astype(x_l.dtype)
    # fold the global-average-pool 1/(H*W) scale into the first fc layer.
    w1s = params["w1"] * jnp.float32(1.0 / HW)

    # TODO(synk): python random.sample(range(0,16384), 64) has no in-kernel
    # equivalent; deterministic JAX sampling glue instead (64 rows = 32 KiB).
    idx = jax.random.choice(sample_key, K_QUEUE, shape=(NUM_NEG,), replace=False)
    cols = jnp.take(params["queue_rows"], idx, axis=0)      # (NUM_NEG, DIM_FEAT)

    full2d = lambda shape: pl.BlockSpec(shape, lambda b, t: (0, 0))
    x_block_bytes = C * TILE * itemsize
    vmem_limit = int(min(96 * 2**20, max(2 * x_block_bytes + 4 * 2**20, 32 * 2**20)))

    # Phase 1: per-image encoder + Mahalanobis mean -> (B, 1, 128) ans in HBM.
    # (If the input DMA is still exposed after tile enlargement, add
    #  pipeline_mode=pl.Buffered(3) on the x BlockSpec only.)
    ans = pl.pallas_call(
        _encode_kernel,
        out_shape=jax.ShapeDtypeStruct((B, 1, 128), jnp.float32),
        grid=(B, n_tiles),
        in_specs=[
            pl.BlockSpec((1, C, TILE), lambda b, t: (b, 0, t)),  # streamed image tile
            full2d((DIM_MLP, C)),           # w_conv^T
            full2d((DIM_MLP, 1)),           # b_conv (column)
            full2d((DIM_MLP, DIM_MLP)),     # w1 * 1/(H*W)
            full2d((1, DIM_MLP)),           # b1
            full2d((DIM_MLP, DIM_FEAT)),    # w2
            full2d((1, DIM_FEAT)),          # b2
            full2d((NUM_NEG, DIM_FEAT)),    # sampled queue rows
            full2d((DIM_FEAT, DIM_FEAT)),   # invD
        ],
        out_specs=pl.BlockSpec((1, 1, 128), lambda b, t: (b, 0, 0)),
        scratch_shapes=[pltpu.VMEM((DIM_MLP, w_fold), jnp.float32)],  # GAP accumulator
        compiler_params=pltpu.CompilerParams(
            dimension_semantics=("parallel", "arbitrary"),
            vmem_limit_bytes=vmem_limit),
    )(x_l, wct, params["b_conv_c"], w1s, params["b1"],
      params["w2"], params["b2"], cols, params["invD"])

    # Phase 2: tiny one-shot kernel (whole arrays in VMEM); output aliased in-place.
    return pl.pallas_call(
        _rank_fixup_kernel,
        out_shape=jax.ShapeDtypeStruct((B, c_out), jnp.float32),
        input_output_aliases={1: 0},
    )(ans.reshape(B, 128), output)


if __name__ == "__main__":
    key = jax.random.PRNGKey(0)
    kp, kx, ko, kt, ks = jax.random.split(key, 5)
    B, C, H, W = 8, 4, 16, 16
    params = init_params(kp, c_in=C)
    im_q = jax.random.normal(kx, (B, C, H, W), jnp.float32)
    output = jax.random.uniform(ko, (B, 4), jnp.float32, minval=-2.0, maxval=2.0)
    target = jax.random.randint(kt, (B,), 0, 10)

    fwd = jax.jit(moco_forward)
    out = fwd(params, im_q, output, target, ks)
    jax.block_until_ready(out)

    # bf16 input path (halves streamed HBM bytes when the producer emits bf16).
    out_bf16 = fwd(params, im_q.astype(jnp.bfloat16), output, target, ks)
    jax.block_until_ready(out_bf16)

    print("KERNEL_OK")
</pallas_src>

<mosaic_0001>
module attributes {stable_mosaic.version = 11 : i64} {
  func.func @_rank_fixup_kernel(%arg0: memref<8x128xf32, #tpu.memory_space<vmem>>, %arg1: memref<8x4xf32, #tpu.memory_space<vmem>>, %arg2: memref<8x4xf32, #tpu.memory_space<vmem>>) attributes {dimension_semantics = [], scalar_prefetch = 0 : i64, scratch_operands = 0 : i64, tpu.core_type = #tpu.core_type<tc>} {
    %c0 = arith.constant 0 : index
    %c0_0 = arith.constant 0 : index
    %0 = vector.load %arg0[%c0, %c0_0] : memref<8x128xf32, #tpu.memory_space<vmem>>, vector<8x128xf32>
    %1 = vector.extract_strided_slice %0 {offsets = [0, 0], sizes = [8, 1], strides = [1, 1]} : vector<8x128xf32> to vector<8x1xf32>
    %2 = tpu.transpose %0, [1, 0] : vector<8x128xf32> -> vector<128x8xf32>
    %3 = vector.extract_strided_slice %2 {offsets = [0, 0], sizes = [1, 8], strides = [1, 1]} : vector<128x8xf32> to vector<1x8xf32>
    %4 = tpu.iota {dimensions = array<i32: 0>} : vector<8x8xi32>
    %5 = tpu.iota {dimensions = array<i32: 1>} : vector<8x8xi32>
    %6 = vector.broadcast %3 : vector<1x8xf32> to vector<8x8xf32>
    %7 = vector.broadcast %1 : vector<8x1xf32> to vector<8x8xf32>
    %8 = arith.cmpf olt, %6, %7 : vector<8x8xf32>
    %9 = vector.broadcast %3 : vector<1x8xf32> to vector<8x8xf32>
    %10 = vector.broadcast %1 : vector<8x1xf32> to vector<8x8xf32>
    %11 = arith.cmpf oeq, %9, %10 : vector<8x8xf32>
    %12 = arith.cmpi slt, %5, %4 : vector<8x8xi32>
    %13 = arith.andi %11, %12 : vector<8x8xi1>
    %14 = arith.ori %8, %13 : vector<8x8xi1>
    %15 = arith.extui %14 : vector<8x8xi1> to vector<8x8xi32>
    %cst = arith.constant dense<0> : vector<8xi32>
    %16 = vector.multi_reduction <add>, %15, %cst [1] : vector<8x8xi32> to vector<8xi32>
    %17 = vector.shape_cast %16 : vector<8xi32> to vector<8x1xi32>
    %c-56_i32 = arith.constant -56 : i32
    %18 = vector.broadcast %c-56_i32 : i32 to vector<8x1xi32>
    %19 = arith.cmpi sge, %17, %18 : vector<8x1xi32>
    %c6_i32 = arith.constant 6 : i32
    %20 = vector.broadcast %c6_i32 : i32 to vector<8x1xi32>
    %21 = arith.cmpi sle, %17, %20 : vector<8x1xi32>
    %22 = arith.andi %19, %21 : vector<8x1xi1>
    %c0_1 = arith.constant 0 : index
    %c0_2 = arith.constant 0 : index
    %23 = vector.load %arg1[%c0_1, %c0_2] : memref<8x4xf32, #tpu.memory_space<vmem>>, vector<8x4xf32>
    %24 = tpu.iota {dimensions = array<i32: 1>} : vector<8x4xi32>
    %c2_i32 = arith.constant 2 : i32
    %25 = vector.broadcast %c2_i32 : i32 to vector<8x4xi32>
    %26 = arith.cmpi eq, %24, %25 : vector<8x4xi32>
    %c3_i32 = arith.constant 3 : i32
    %27 = vector.broadcast %c3_i32 : i32 to vector<8x4xi32>
    %28 = arith.cmpi eq, %24, %27 : vector<8x4xi32>
    %29 = math.absf %23 : vector<8x4xf32>
    %cst_3 = arith.constant 0.000000e+00 : f32
    %30 = vector.broadcast %cst_3 : f32 to vector<8x4xf32>
    %31 = arith.select %26, %29, %30 : vector<8x4xi1>, vector<8x4xf32>
    %cst_4 = arith.constant dense<0.000000e+00> : vector<8xf32>
    %32 = vector.multi_reduction <add>, %31, %cst_4 [1] : vector<8x4xf32> to vector<8xf32>
    %33 = vector.shape_cast %32 : vector<8xf32> to vector<8x1xf32>
    %34 = math.absf %23 : vector<8x4xf32>
    %cst_5 = arith.constant 0.000000e+00 : f32
    %35 = vector.broadcast %cst_5 : f32 to vector<8x4xf32>
    %36 = arith.select %28, %34, %35 : vector<8x4xi1>, vector<8x4xf32>
    %cst_6 = arith.constant dense<0.000000e+00> : vector<8xf32>
    %37 = vector.multi_reduction <add>, %36, %cst_6 [1] : vector<8x4xf32> to vector<8xf32>
    %38 = vector.shape_cast %37 : vector<8xf32> to vector<8x1xf32>
    %cst_7 = arith.constant 1.000000e+00 : f32
    %39 = vector.broadcast %cst_7 : f32 to vector<8x1xf32>
    %40 = arith.cmpf olt, %33, %39 : vector<8x1xf32>
    %cst_8 = arith.constant 1.000000e+00 : f32
    %41 = vector.broadcast %cst_8 : f32 to vector<8x1xf32>
    %42 = arith.cmpf olt, %38, %41 : vector<8x1xf32>
    %43 = arith.ori %40, %42 : vector<8x1xi1>
    %44 = arith.andi %22, %43 : vector<8x1xi1>
    %45 = vector.broadcast %44 : vector<8x1xi1> to vector<8x4xi1>
    %46 = arith.andi %45, %26 : vector<8x4xi1>
    %cst_9 = arith.constant -5.000000e+00 : f32
    %47 = vector.broadcast %cst_9 : f32 to vector<8x4xf32>
    %48 = arith.select %46, %47, %23 : vector<8x4xi1>, vector<8x4xf32>
    %49 = vector.broadcast %44 : vector<8x1xi1> to vector<8x4xi1>
    %50 = arith.andi %49, %28 : vector<8x4xi1>
    %cst_10 = arith.constant 5.000000e+00 : f32
    %51 = vector.broadcast %cst_10 : f32 to vector<8x4xf32>
    %52 = arith.select %50, %51, %48 : vector<8x4xi1>, vector<8x4xf32>
    %c0_11 = arith.constant 0 : index
    %c0_12 = arith.constant 0 : index
    %53 = vector.load %arg2[%c0_11, %c0_12] : memref<8x4xf32, #tpu.memory_space<vmem>>, vector<8x4xf32>
    tpu.vector_store %arg2[%c0_11, %c0_12], %52 {strides = array<i32>} : memref<8x4xf32, #tpu.memory_space<vmem>>, vector<8x4xf32>,
    return
  }
}

module attributes {stable_mosaic.version = 11 : i64} {
  func.func @_encode_kernel(%arg0: i32, %arg1: i32, %arg2: memref<1x4x256xf32, #tpu.memory_space<vmem>>, %arg3: memref<32x4xf32, #tpu.memory_space<vmem>>, %arg4: memref<32x1xf32, #tpu.memory_space<vmem>>, %arg5: memref<32x32xf32, #tpu.memory_space<vmem>>, %arg6: memref<1x32xf32, #tpu.memory_space<vmem>>, %arg7: memref<32x128xf32, #tpu.memory_space<vmem>>, %arg8: memref<1x128xf32, #tpu.memory_space<vmem>>, %arg9: memref<64x128xf32, #tpu.memory_space<vmem>>, %arg10: memref<128x128xf32, #tpu.memory_space<vmem>>, %arg11: memref<1x1x128xf32, #tpu.memory_space<vmem>>, %arg12: memref<32x128xf32, #tpu.memory_space<vmem>>) attributes {dimension_semantics = [#tpu.dimension_semantics<parallel>, #tpu.dimension_semantics<arbitrary>], iteration_bounds = array<i64: 8, 1>, scalar_prefetch = 0 : i64, scratch_operands = 1 : i64, tpu.core_type = #tpu.core_type<tc>, window_params = [{transform_indices = @transform_0, window_bounds = array<i64: 1, 4, 256>}, {pipeline_mode = #tpu.pipeline_mode<synchronous>, transform_indices = @transform_1, window_bounds = array<i64: 32, 4>}, {pipeline_mode = #tpu.pipeline_mode<synchronous>, transform_indices = @transform_2, window_bounds = array<i64: 32, 1>}, {pipeline_mode = #tpu.pipeline_mode<synchronous>, transform_indices = @transform_3, window_bounds = array<i64: 32, 32>}, {pipeline_mode = #tpu.pipeline_mode<synchronous>, transform_indices = @transform_4, window_bounds = array<i64: 1, 32>}, {pipeline_mode = #tpu.pipeline_mode<synchronous>, transform_indices = @transform_5, window_bounds = array<i64: 32, 128>}, {pipeline_mode = #tpu.pipeline_mode<synchronous>, transform_indices = @transform_6, window_bounds = array<i64: 1, 128>}, {pipeline_mode = #tpu.pipeline_mode<synchronous>, transform_indices = @transform_7, window_bounds = array<i64: 64, 128>}, {pipeline_mode = #tpu.pipeline_mode<synchronous>, transform_indices = @transform_8, window_bounds = array<i64: 128, 128>}, {transform_indices = @transform_9, window_bounds = array<i64: 1, 1, 128>}]} {
    %c0_i32 = arith.constant 0 : i32
    %0 = arith.cmpi eq, %arg1, %c0_i32 : i32
    %1 = arith.extui %0 : i1 to i32
    %c0_i32_0 = arith.constant 0 : i32
    %2 = arith.cmpi ne, %1, %c0_i32_0 : i32
    scf.if %2 {
      %cst_14 = arith.constant 0.000000e+00 : f32
      %24 = vector.broadcast %cst_14 : f32 to vector<1x1x128xf32>
      %c0_15 = arith.constant 0 : index
      %c0_16 = arith.constant 0 : index
      %c0_17 = arith.constant 0 : index
      %25 = vector.load %arg11[%c0_15, %c0_16, %c0_17] : memref<1x1x128xf32, #tpu.memory_space<vmem>>, vector<1x1x128xf32>
      tpu.vector_store %arg11[%c0_15, %c0_16, %c0_17], %24 {strides = array<i32>} : memref<1x1x128xf32, #tpu.memory_space<vmem>>, vector<1x1x128xf32>,
    } else {
    }
    %c0 = arith.constant 0 : index
    %c0_1 = arith.constant 0 : index
    %c0_2 = arith.constant 0 : index
    %3 = vector.load %arg2[%c0, %c0_1, %c0_2] : memref<1x4x256xf32, #tpu.memory_space<vmem>>, vector<1x4x256xf32>
    %4 = vector.shape_cast %3 : vector<1x4x256xf32> to vector<4x256xf32>
    %c0_3 = arith.constant 0 : index
    %c0_4 = arith.constant 0 : index
    %5 = vector.load %arg3[%c0_3, %c0_4] : memref<32x4xf32, #tpu.memory_space<vmem>>, vector<32x4xf32>
    %cst = arith.constant dense<0.000000e+00> : vector<32x256xf32>
    %6 = tpu.matmul %5, %4, %cst {dimension_numbers = #tpu.dot_dimension_numbers<[1], [0], [0], [1], [0, 0, 1, 1], [], []>} : vector<32x4xf32>, vector<4x256xf32>, vector<32x256xf32> -> vector<32x256xf32>
    %c0_5 = arith.constant 0 : index
    %c0_6 = arith.constant 0 : index
    %7 = vector.load %arg4[%c0_5, %c0_6] : memref<32x1xf32, #tpu.memory_space<vmem>>, vector<32x1xf32>
    %8 = vector.broadcast %7 : vector<32x1xf32> to vector<32x256xf32>
    %9 = arith.addf %6, %8 : vector<32x256xf32>
    %cst_7 = arith.constant 0.000000e+00 : f32
    %10 = vector.broadcast %cst_7 : f32 to vector<32x256xf32>
    %11 = arith.maximumf %9, %10 : vector<32x256xf32>
    %12 = vector.extract_strided_slice %11 {offsets = [0, 0], sizes = [32, 128], strides = [1, 1]} : vector<32x256xf32> to vector<32x128xf32>
    %13 = vector.extract_strided_slice %11 {offsets = [0, 128], sizes = [32, 128], strides = [1, 1]} : vector<32x256xf32> to vector<32x128xf32>
    %14 = arith.addf %12, %13 : vector<32x128xf32>
    %c0_i32_8 = arith.constant 0 : i32
    %15 = arith.cmpi eq, %arg1, %c0_i32_8 : i32
    %16 = arith.extui %15 : i1 to i32
    %c0_i32_9 = arith.constant 0 : i32
    %17 = arith.cmpi ne, %16, %c0_i32_9 : i32
    scf.if %17 {
      %c0_14 = arith.constant 0 : index
      %c0_15 = arith.constant 0 : index
      %24 = vector.load %arg12[%c0_14, %c0_15] : memref<32x128xf32, #tpu.memory_space<vmem>>, vector<32x128xf32>
      tpu.vector_store %arg12[%c0_14, %c0_15], %14 {strides = array<i32>} : memref<32x128xf32, #tpu.memory_space<vmem>>, vector<32x128xf32>,
    } else {
    }
    %c0_i32_10 = arith.constant 0 : i32
    %18 = arith.cmpi ne, %arg1, %c0_i32_10 : i32
    %19 = arith.extui %18 : i1 to i32
    %c0_i32_11 = arith.constant 0 : i32
    %20 = arith.cmpi ne, %19, %c0_i32_11 : i32
    scf.if %20 {
      %c0_14 = arith.constant 0 : index
      %c0_15 = arith.constant 0 : index
      %24 = vector.load %arg12[%c0_14, %c0_15] : memref<32x128xf32, #tpu.memory_space<vmem>>, vector<32x128xf32>
      %25 = arith.addf %24, %14 : vector<32x128xf32>
      %c0_16 = arith.constant 0 : index
      %c0_17 = arith.constant 0 : index
      %26 = vector.load %arg12[%c0_16, %c0_17] : memref<32x128xf32, #tpu.memory_space<vmem>>, vector<32x128xf32>
      tpu.vector_store %arg12[%c0_16, %c0_17], %25 {strides = array<i32>} : memref<32x128xf32, #tpu.memory_space<vmem>>, vector<32x128xf32>,
    } else {
    }
    %c0_i32_12 = arith.constant 0 : i32
    %21 = arith.cmpi eq, %arg1, %c0_i32_12 : i32
    %22 = arith.extui %21 : i1 to i32
    %c0_i32_13 = arith.constant 0 : i32
    %23 = arith.cmpi ne, %22, %c0_i32_13 : i32
    scf.if %23 {
      %c0_14 = arith.constant 0 : index
      %c0_15 = arith.constant 0 : index
      %24 = vector.load %arg12[%c0_14, %c0_15] : memref<32x128xf32, #tpu.memory_space<vmem>>, vector<32x128xf32>
      %cst_16 = arith.constant dense<0.000000e+00> : vector<32xf32>
      %25 = vector.multi_reduction <add>, %24, %cst_16 [1] : vector<32x128xf32> to vector<32xf32>
      %26 = vector.shape_cast %25 : vector<32xf32> to vector<32x1xf32>
      %27 = tpu.transpose %26, [1, 0] : vector<32x1xf32> -> vector<1x32xf32>
      %c0_17 = arith.constant 0 : index
      %c0_18 = arith.constant 0 : index
      %28 = vector.load %arg5[%c0_17, %c0_18] : memref<32x32xf32, #tpu.memory_space<vmem>>, vector<32x32xf32>
      %cst_19 = arith.constant dense<0.000000e+00> : vector<1x32xf32>
      %29 = tpu.matmul %27, %28, %cst_19 {dimension_numbers = #tpu.dot_dimension_numbers<[1], [0], [0], [1], [0, 0, 1, 1], [], []>} : vector<1x32xf32>, vector<32x32xf32>, vector<1x32xf32> -> vector<1x32xf32>
      %c0_20 = arith.constant 0 : index
      %c0_21 = arith.constant 0 : index
      %30 = vector.load %arg6[%c0_20, %c0_21] : memref<1x32xf32, #tpu.memory_space<vmem>>, vector<1x32xf32>
      %31 = arith.addf %29, %30 : vector<1x32xf32>
      %cst_22 = arith.constant 0.000000e+00 : f32
      %32 = vector.broadcast %cst_22 : f32 to vector<1x32xf32>
      %33 = arith.maximumf %31, %32 : vector<1x32xf32>
      %c0_23 = arith.constant 0 : index
      %c0_24 = arith.constant 0 : index
      %34 = vector.load %arg7[%c0_23, %c0_24] : memref<32x128xf32, #tpu.memory_space<vmem>>, vector<32x128xf32>
      %cst_25 = arith.constant dense<0.000000e+00> : vector<1x128xf32>
      %35 = tpu.matmul %33, %34, %cst_25 {dimension_numbers = #tpu.dot_dimension_numbers<[1], [0], [0], [1], [0, 0, 1, 1], [], []>} : vector<1x32xf32>, vector<32x128xf32>, vector<1x128xf32> -> vector<1x128xf32>
      %c0_26 = arith.constant 0 : index
      %c0_27 = arith.constant 0 : index
      %36 = vector.load %arg8[%c0_26, %c0_27] : memref<1x128xf32, #tpu.memory_space<vmem>>, vector<1x128xf32>
      %37 = arith.addf %35, %36 : vector<1x128xf32>
      %38 = arith.mulf %37, %37 : vector<1x128xf32>
      %cst_28 = arith.constant dense<0.000000e+00> : vector<1xf32>
      %39 = vector.multi_reduction <add>, %38, %cst_28 [1] : vector<1x128xf32> to vector<1xf32>
      %40 = vector.shape_cast %39 : vector<1xf32> to vector<1x1xf32>
      %cst_29 = arith.constant 1.000000e-24 : f32
      %41 = vector.broadcast %cst_29 : f32 to vector<1x1xf32>
      %42 = arith.maximumf %40, %41 : vector<1x1xf32>
      %43 = math.rsqrt %42 : vector<1x1xf32>
      %44 = vector.broadcast %43 : vector<1x1xf32> to vector<1x128xf32>
      %45 = arith.mulf %37, %44 : vector<1x128xf32>
      %c0_30 = arith.constant 0 : index
      %c0_31 = arith.constant 0 : index
      %46 = vector.load %arg9[%c0_30, %c0_31] : memref<64x128xf32, #tpu.memory_space<vmem>>, vector<64x128xf32>
      %47 = vector.broadcast %45 : vector<1x128xf32> to vector<64x128xf32>
      %48 = arith.subf %47, %46 : vector<64x128xf32>
      %c0_32 = arith.constant 0 : index
      %c0_33 = arith.constant 0 : index
      %49 = vector.load %arg10[%c0_32, %c0_33] : memref<128x128xf32, #tpu.memory_space<vmem>>, vector<128x128xf32>
      %cst_34 = arith.constant dense<0.000000e+00> : vector<64x128xf32>
      %50 = tpu.matmul %48, %49, %cst_34 {dimension_numbers = #tpu.dot_dimension_numbers<[1], [0], [0], [1], [0, 0, 1, 1], [], []>} : vector<64x128xf32>, vector<128x128xf32>, vector<64x128xf32> -> vector<64x128xf32>
      %51 = arith.mulf %50, %48 : vector<64x128xf32>
      %cst_35 = arith.constant dense<0.000000e+00> : vector<64xf32>
      %52 = vector.multi_reduction <add>, %51, %cst_35 [1] : vector<64x128xf32> to vector<64xf32>
      %53 = vector.shape_cast %52 : vector<64xf32> to vector<64x1xf32>
      %cst_36 = arith.constant 0.000000e+00 : f32
      %54 = vector.broadcast %cst_36 : f32 to vector<64x1xf32>
      %55 = arith.maximumf %53, %54 : vector<64x1xf32>
      %56 = math.sqrt %55 : vector<64x1xf32>
      %cst_37 = arith.constant dense<0.000000e+00> : vector<1xf32>
      %57 = vector.multi_reduction <add>, %56, %cst_37 [0] : vector<64x1xf32> to vector<1xf32>
      %58 = vector.shape_cast %57 : vector<1xf32> to vector<1x1xf32>
      %cst_38 = arith.constant 1.562500e-02 : f32
      %59 = vector.broadcast %cst_38 : f32 to vector<1x1xf32>
      %60 = arith.mulf %58, %59 : vector<1x1xf32>
      %61 = vector.shape_cast %60 : vector<1x1xf32> to vector<1x1x1xf32>
      %62 = vector.broadcast %61 : vector<1x1x1xf32> to vector<1x1x128xf32>
      %c0_39 = arith.constant 0 : index
      %c0_40 = arith.constant 0 : index
      %c0_41 = arith.constant 0 : index
      %63 = vector.load %arg11[%c0_39, %c0_40, %c0_41] : memref<1x1x128xf32, #tpu.memory_space<vmem>>, vector<1x1x128xf32>
      tpu.vector_store %arg11[%c0_39, %c0_40, %c0_41], %62 {strides = array<i32>} : memref<1x1x128xf32, #tpu.memory_space<vmem>>, vector<1x1x128xf32>,
    } else {
    }
    return
  }
  func.func @transform_0(%arg0: i32, %arg1: i32) -> (i32, i32, i32) {
    %c0_i32 = arith.constant 0 : i32
    %c0_i32_0 = arith.constant 0 : i32
    return %arg0, %c0_i32, %arg1 : i32, i32, i32
  }
  func.func @transform_1(%arg0: i32, %arg1: i32) -> (i32, i32) {
    %c0_i32 = arith.constant 0 : i32
    %c0_i32_0 = arith.constant 0 : i32
    %c0_i32_1 = arith.constant 0 : i32
    return %c0_i32, %c0_i32_0 : i32, i32
  }
  func.func @transform_2(%arg0: i32, %arg1: i32) -> (i32, i32) {
    %c0_i32 = arith.constant 0 : i32
    %c0_i32_0 = arith.constant 0 : i32
    %c0_i32_1 = arith.constant 0 : i32
    return %c0_i32, %c0_i32_0 : i32, i32
  }
  func.func @transform_3(%arg0: i32, %arg1: i32) -> (i32, i32) {
    %c0_i32 = arith.constant 0 : i32
    %c0_i32_0 = arith.constant 0 : i32
    %c0_i32_1 = arith.constant 0 : i32
    return %c0_i32, %c0_i32_0 : i32, i32
  }
  func.func @transform_4(%arg0: i32, %arg1: i32) -> (i32, i32) {
    %c0_i32 = arith.constant 0 : i32
    %c0_i32_0 = arith.constant 0 : i32
    %c0_i32_1 = arith.constant 0 : i32
    return %c0_i32, %c0_i32_0 : i32, i32
  }
  func.func @transform_5(%arg0: i32, %arg1: i32) -> (i32, i32) {
    %c0_i32 = arith.constant 0 : i32
    %c0_i32_0 = arith.constant 0 : i32
    %c0_i32_1 = arith.constant 0 : i32
    return %c0_i32, %c0_i32_0 : i32, i32
  }
  func.func @transform_6(%arg0: i32, %arg1: i32) -> (i32, i32) {
    %c0_i32 = arith.constant 0 : i32
    %c0_i32_0 = arith.constant 0 : i32
    %c0_i32_1 = arith.constant 0 : i32
    return %c0_i32, %c0_i32_0 : i32, i32
  }
  func.func @transform_7(%arg0: i32, %arg1: i32) -> (i32, i32) {
    %c0_i32 = arith.constant 0 : i32
    %c0_i32_0 = arith.constant 0 : i32
    %c0_i32_1 = arith.constant 0 : i32
    return %c0_i32, %c0_i32_0 : i32, i32
  }
  func.func @transform_8(%arg0: i32, %arg1: i32) -> (i32, i32) {
    %c0_i32 = arith.constant 0 : i32
    %c0_i32_0 = arith.constant 0 : i32
    %c0_i32_1 = arith.constant 0 : i32
    return %c0_i32, %c0_i32_0 : i32, i32
  }
  func.func @transform_9(%arg0: i32, %arg1: i32) -> (i32, i32, i32) {
    %c0_i32 = arith.constant 0 : i32
    %c0_i32_0 = arith.constant 0 : i32
    %c0_i32_1 = arith.constant 0 : i32
    return %arg0, %c0_i32, %c0_i32_0 : i32, i32, i32
  }
}

</mosaic_0001>

<llo_original>
// kernel: moco_forward.3
$region0: #{moco_forward.3}
  #allocation0 [shape = 'u32[]', space=smem, size = 0x4, offset = 0x4, fixed_abs, tag = 'smem constant byte address 0x4 - core index']
  #allocation1 [shape = 'u32[144,128]{1,0:T(1,128)}', space=vmem, size = 0x12000, scoped, tag = 'internal scratch']
  %s0 = inlined_call_operand.vmem [shape: f32[8,128], index: 0, kind: input, shape index: {}]
  %s1 = inlined_call_operand.vmem [shape: f32[8,4], index: 1, kind: input, shape index: {}, may-alias: {1,2}]
  %s2 = inlined_call_operand.vmem [shape: f32[8,4], index: 2, kind: output, shape index: {}, may-alias: {1,2}]
  %s3 = sld [smem:[#allocation0]]
  $region18: #{moco_forward.3} parent=0
    _
  %s5 = ssub.s32 1, %s3
  %s6 = scalar_select 0, %s5, %s3
  // Predicated region
  $region2: #{moco_forward.3} parent=0 // pred_check
    _
  $region3: #{moco_forward.3} parent=0 // pred_check_branch
    %8 = sbr.rel (0) target = $region5
  $region4: #{moco_forward.3} parent=0 // pred_region
    _
  $region5: #{moco_forward.3} parent=0 // pred_fallthru
    _
  // Predicated region
  $region6: #{moco_forward.3} parent=0 // pred_check
    _
  $region7: #{moco_forward.3} parent=0 // pred_check_branch
    %10 = sbr.rel (0) target = $region9
  $region8: #{moco_forward.3} parent=0 // pred_region
    _
  $region9: #{moco_forward.3} parent=0 // pred_fallthru
    _
  %v11 = vld [vmem:[%s0] sm:$0xff]
  %12 = vxpose.xlu0.b32.start [1/16] %v11, 128
  %13 = vxpose.xlu0.b32.cont [2/16] 0.0, 128
  %14 = vxpose.xlu0.b32.cont [3/16] 0.0, 128
  %15 = vxpose.xlu0.b32.cont [4/16] 0.0, 128
  %16 = vxpose.xlu0.b32.cont [5/16] 0.0, 128
  %17 = vxpose.xlu0.b32.cont [6/16] 0.0, 128
  %18 = vxpose.xlu0.b32.cont [7/16] 0.0, 128
  %19 = vxpose.xlu0.b32.cont [8/16] 0.0, 128
  %20 = vxpose.xlu0.b32.cont [9/16] 0.0, 128
  %21 = vxpose.xlu0.b32.cont [10/16] 0.0, 128
  %22 = vxpose.xlu0.b32.cont [11/16] 0.0, 128
  %23 = vxpose.xlu0.b32.cont [12/16] 0.0, 128
  %24 = vxpose.xlu0.b32.cont [13/16] 0.0, 128
  %25 = vxpose.xlu0.b32.cont [14/16] 0.0, 128
  %26 = vxpose.xlu0.b32.cont [15/16] 0.0, 128
  %27 = vxpose.xlu0.b32.end [16/16] 0.0, 128
  %v28 = vpop.trf.xlu0
  %v29 = vpop.trf.xlu0
  %v30 = vpop.trf.xlu0
  %v31 = vpop.trf.xlu0
  %v32 = vpop.trf.xlu0
  %v33 = vpop.trf.xlu0
  %v34 = vpop.trf.xlu0
  %v35 = vpop.trf.xlu0
  %v36 = vpop.trf.xlu0
  %v37 = vpop.trf.xlu0
  %v38 = vpop.trf.xlu0
  %v39 = vpop.trf.xlu0
  %v40 = vpop.trf.xlu0
  %v41 = vpop.trf.xlu0
  %v42 = vpop.trf.xlu0
  %v43 = vpop.trf.xlu0
  %v44 = vlaneseq
  %v45 = vshrl.u32 %v44, 7
  %v46 = vlaneseq
  %v47 = vand.u32 %v46, 127
  %v48 = vlaneseq
  %v49 = vshrl.u32 %v48, 7
  %v50 = vsub.s32 0, %v49
  %v51 = vrot.slane %v28, %v50
  %53 = vset.pattern.permute.xlu0 0
  %54 = vperm.xlu0 %53, %v11
  %v55 = vpop.permute.xlu0 %54
  %vm57 = vcmp.lt.f32.partialorder %v51, %v55
  %vm58 = vcmp.eq.f32.partialorder %v51, %v55
  %vm59 = vcmp.lt.s32.totalorder %v47, %v45
  %vm60 = vmand %vm58, %vm59
  %vm61 = vmor %vm57, %vm60
  %v62 = vsel %vm61, 1, 0
  %vm63 = vcmask 64512
  %v64 = vsel %vm63, %v62, 0
  %v65 = vand.u32 %v64, 65535
  %v66 = vshrl.u32 %v64, 16
  %v67 = vcvt.s32.f32 %v65
  %v68 = vcvt.s32.f32 %v66
  %69 = vadd.xlane.f32.xlu0 %v67
  %v70 = vpop.xlane.xlu0 %69
  %71 = vadd.xlane.f32.xlu0 %v68
  %v72 = vpop.xlane.xlu0 %71
  %v73 = vcvt.f32.s32 %v70
  %v74 = vcvt.f32.s32 %v72
  %v75 = vshll.u32 %v74, 16
  %v76 = vadd.s32 %v75, %v73
  %vm77 = vcmp.ge.s32.totalorder %v76, 4294967240
  %vm78 = vcmp.le.s32.totalorder %v76, 6
  %vm79 = vmand %vm77, %vm78
  %v80 = vld [vmem:[%s1] sm:$0xff]
  %vm81 = vcmp.eq.s32.totalorder %v47, 2
  %vm82 = vcmp.eq.s32.totalorder %v47, 3
  %v83 = vand.u32 2147483647, %v80
  %v84 = vsel %vm81, %v83, 0.0
  %vm85 = vcmask 31744
  %v86 = vsel %vm85, %v84, 0.0
  %87 = vadd.xlane.f32.xlu0 %v86
  %v88 = vpop.xlane.xlu0 %87
  %v89 = vsel %vm82, %v83, 0.0
  %v90 = vsel %vm85, %v89, 0.0
  %91 = vadd.xlane.f32.xlu0 %v90
  %v92 = vpop.xlane.xlu0 %91
  %vm93 = vcmp.lt.f32.partialorder %v88, 1.0
  %vm94 = vcmp.lt.f32.partialorder %v92, 1.0
  %vm95 = vmor %vm93, %vm94
  %vm96 = vmand %vm79, %vm95
  %v97 = vsel %vm96, 1, 0
  %vm98 = vcmp.eq.s32.totalorder %v97, 1
  %vm99 = vmand %vm98, %vm81
  %v100 = vsel %vm99, -5.0, %v80
  %vm101 = vmand %vm98, %vm82
  %v102 = vsel %vm101, 5.0, %v100
  %103 = vst.msk [vmem:[%s2] sm:$0xff] %vm85, %v102
  // Predicated region
  $region10: #{moco_forward.3} parent=0 // pred_check
    _
  $region11: #{moco_forward.3} parent=0 // pred_check_branch
    %105 = sbr.rel (0) target = $region13
  $region12: #{moco_forward.3} parent=0 // pred_region
    _
  $region13: #{moco_forward.3} parent=0 // pred_fallthru
    _
  // Predicated region
  $region14: #{moco_forward.3} parent=0 // pred_check
    _
  $region15: #{moco_forward.3} parent=0 // pred_check_branch
    %107 = sbr.rel (0) target = $region17
  $region16: #{moco_forward.3} parent=0 // pred_region
    _
  $region17: #{moco_forward.3} parent=0 // pred_fallthru
    _

// kernel: moco_forward.2
$region0: #{moco_forward.2}
  #allocation0 [shape = 'u32[]', space=smem, size = 0x4, offset = 0x4, fixed_abs, tag = 'smem constant byte address 0x4 - core index']
  #allocation1 [shape = 'u32[144,128]{1,0:T(1,128)}', space=vmem, size = 0x12000, scoped, tag = 'internal scratch']
  #allocation2 [shape = 'f32[32,128]{1,0:T(8,128)}', space=vmem, size = 0x4000, scoped, tag = 'scratch operand']
  %s0 = inlined_call_operand.vmem [shape: f32[8,4,256], index: 0, kind: input, shape index: {}]
  %s1 = inlined_call_operand.vmem [shape: f32[32,4], index: 1, kind: input, shape index: {}]
  %s2 = inlined_call_operand.vmem [shape: f32[32,1], index: 2, kind: input, shape index: {}]
  %s3 = inlined_call_operand.vmem [shape: f32[32,32], index: 3, kind: input, shape index: {}]
  %s4 = inlined_call_operand.hbm [shape: f32[1,32], index: 4, kind: input, shape index: {}]
  %s5 = inlined_call_operand.hbm [shape: f32[32,128], index: 5, kind: input, shape index: {}]
  %s6 = inlined_call_operand.hbm [shape: f32[1,128], index: 6, kind: input, shape index: {}]
  %s7 = inlined_call_operand.vmem [shape: f32[64,128], index: 7, kind: input, shape index: {}]
  %s8 = inlined_call_operand.hbm [shape: f32[128,128], index: 8, kind: input, shape index: {}]
  %s9 = inlined_call_operand.vmem [shape: f32[8,1,128], index: 9, kind: output, shape index: {}]
  %s10 = sld [smem:[#allocation0]]
  $region101: #{moco_forward.2} parent=0
    _
  %s12 = ssub.s32 1, %s10
  %s13 = scalar_select 0, %s12, %s10
  $region1: #{moco_forward.2} parent=0
    #allocation3 [shape = 'u8[512]{0}', space=vmem, size = 0x400, scoped, tag = 'input window, operand 4, single buffered']
    #allocation4 [shape = 's32[2]{0}', space=sflag, size = 0x8, scoped, tag = 'scoped memory for moco_forward.2']
    #allocation5 [shape = 'u8[16384]{0}', space=vmem, size = 0x4000, scoped, tag = 'input window, operand 5, single buffered']
    #allocation6 [shape = 's32[1]{0}', space=sflag, size = 0x4, scoped, tag = 'scoped memory for moco_forward.2']
    #allocation7 [shape = 'u8[512]{0}', space=vmem, size = 0x400, scoped, tag = 'input window, operand 6, single buffered']
    #allocation8 [shape = 'u8[65536]{0}', space=vmem, size = 0x10000, scoped, tag = 'input window, operand 8, single buffered']
    #allocation9 [shape = 's32[1]{0}', space=sflag, size = 0x4, scoped, tag = 'scoped memory for moco_forward.2']
    %14 = vsyncpa [#allocation4], 0
    %15 = vsyncpa [#allocation6], 0
    %16 = vsyncpa [#allocation9], 0
    loop: start=0, step=1, limit=10
    $region2: #{moco_forward.2} parent=1 // loop_pre_header
      _
    $region3: #{moco_forward.2} parent=1 // loop_header
      %s18 = sphi 0, %s22
      %p19 = scmp.ge.s32.totalorder %s18, 10
      %s25 = sphi 0, %s37
      %s26 = sphi 0, %s33
      %s27 = sphi 0, %s25
      %s28 = sphi 0, %s26
      %s29 = sphi 0, %s27
      %s30 = sphi 0, %s28
      %s42 = sphi 0, %s44
      %s45 = sphi 0, %s42
      %s46 = sphi 0, %s45
      %s62 = sphi 0, %s46
      %s66 = sphi 0, %s66
      %s68 = sphi 0, %s66
      %s69 = sphi 0, %s68
      %s83 = sphi 0, %s69
      %s87 = sphi 0, %s87
      %s89 = sphi 0, %s87
      %s90 = sphi 0, %s89
      %s104 = sphi 0, %s90
      %s108 = sphi 0, %s108
      %s110 = sphi 0, %s108
      %s111 = sphi 0, %s110
      %s125 = sphi 0, %s111
      %s129 = sphi 0, %s129
      %s131 = sphi 0, %s129
      %s132 = sphi 0, %s131
      %s146 = sphi 0, %s132
      %s150 = sphi 0, %s150
      %s152 = sphi 0, %s150
      %s153 = sphi 0, %s152
      %s167 = sphi 0, %s153
      %s171 = sphi 0, %s171
      %s173 = sphi 0, %s171
      %s174 = sphi 0, %s173
      %s188 = sphi 0, %s174
      %s192 = sphi 0, %s192
      %s194 = sphi 0, %s192
      %s195 = sphi 0, %s194
      %s209 = sphi 0, %s195
      %s213 = sphi 0, %s213
      %s215 = sphi 0, %s213
      %s216 = sphi 0, %s215
      %s230 = sphi 0, %s216
      %s236 = sphi 0, %s238
      %s239 = sphi 0, %s236
      %s240 = sphi 0, %s239
      %s256 = sphi 0, %s240
    $region4: #{moco_forward.2} parent=1 // loop_header_branch
      %21 = sbr.rel (%p19) target = $region8
    $region5: #{moco_forward.2} parent=1 // loop_body
      %s23 = ssub.s32 %s18, 1
      %s24 = ssub.s32 %s18, 2
      %s31 = sadd.s32 1, %s26
      %p32 = scmp.ge.s32.totalorder %s31, 1
      %s33 = scalar_select %p32, 0, %s31
      %s34 = sadd.s32 1, %s25
      %s35 = scalar_select %p32, %s34, %s25
      %p36 = scmp.ge.s32.totalorder %s35, 8
      %s37 = scalar_select %p36, 0, %s35
      %s38 = ssub.s32 %s25, %s37
      %s39 = ssub.s32 %s26, %s33
      %s40 = sor.u32 %s38, %s39
      %p41 = scmp.eq.s32.totalorder %s40, 0
      %s43 = sadd.s32 %s42, 1
      %s44 = scalar_select %p41, %s42, %s43
      %p47 = pneg %p41
      %p48 = scmp.eq.s32.totalorder %s18, 7
      %p49 = por %p47, %p48
      %p50 = scmp.ne.s32.totalorder %s42, %s45
      %p51 = scmp.eq.s32.totalorder %s18, 0
      %p52 = por %p50, %p51
      %p53 = scmp.ne.s32.totalorder %s42, %s45
      %p54 = scmp.eq.s32.totalorder %s23, 7
      %p55 = por %p53, %p54
      %p56 = scmp.ne.s32.totalorder %s45, %s46
      %p57 = scmp.eq.s32.totalorder %s23, 0
      %p58 = por %p56, %p57
      %p59 = scmp.ne.s32.totalorder %s45, %s46
      %p60 = scmp.eq.s32.totalorder %s24, 7
      %p61 = por %p59, %p60
      %p63 = scmp.ne.s32.totalorder %s46, %s62
      %p64 = scmp.eq.s32.totalorder %s24, 0
      %p65 = por %p63, %p64
      %s67 = sadd.s32 %s66, 1
      %p70 = scmp.eq.s32.totalorder %s18, 7
      %p71 = scmp.ne.s32.totalorder %s66, %s68
      %p72 = scmp.eq.s32.totalorder %s18, 0
      %p73 = por %p71, %p72
      %p74 = scmp.ne.s32.totalorder %s66, %s68
      %p75 = scmp.eq.s32.totalorder %s23, 7
      %p76 = por %p74, %p75
      %p77 = scmp.ne.s32.totalorder %s68, %s69
      %p78 = scmp.eq.s32.totalorder %s23, 0
      %p79 = por %p77, %p78
      %p80 = scmp.ne.s32.totalorder %s68, %s69
      %p81 = scmp.eq.s32.totalorder %s24, 7
      %p82 = por %p80, %p81
      %p84 = scmp.ne.s32.totalorder %s69, %s83
      %p85 = scmp.eq.s32.totalorder %s24, 0
      %p86 = por %p84, %p85
      %s88 = sadd.s32 %s87, 1
      %p91 = scmp.eq.s32.totalorder %s18, 7
      %p92 = scmp.ne.s32.totalorder %s87, %s89
      %p93 = scmp.eq.s32.totalorder %s18, 0
      %p94 = por %p92, %p93
      %p95 = scmp.ne.s32.totalorder %s87, %s89
      %p96 = scmp.eq.s32.totalorder %s23, 7
      %p97 = por %p95, %p96
      %p98 = scmp.ne.s32.totalorder %s89, %s90
      %p99 = scmp.eq.s32.totalorder %s23, 0
      %p100 = por %p98, %p99
      %p101 = scmp.ne.s32.totalorder %s89, %s90
      %p102 = scmp.eq.s32.totalorder %s24, 7
      %p103 = por %p101, %p102
      %p105 = scmp.ne.s32.totalorder %s90, %s104
      %p106 = scmp.eq.s32.totalorder %s24, 0
      %p107 = por %p105, %p106
      %s109 = sadd.s32 %s108, 1
      %p112 = scmp.eq.s32.totalorder %s18, 7
      %p113 = scmp.ne.s32.totalorder %s108, %s110
      %p114 = scmp.eq.s32.totalorder %s18, 0
      %p115 = por %p113, %p114
      %p116 = scmp.ne.s32.totalorder %s108, %s110
      %p117 = scmp.eq.s32.totalorder %s23, 7
      %p118 = por %p116, %p117
      %p119 = scmp.ne.s32.totalorder %s110, %s111
      %p120 = scmp.eq.s32.totalorder %s23, 0
      %p121 = por %p119, %p120
      %p122 = scmp.ne.s32.totalorder %s110, %s111
      %p123 = scmp.eq.s32.totalorder %s24, 7
      %p124 = por %p122, %p123
      %p126 = scmp.ne.s32.totalorder %s111, %s125
      %p127 = scmp.eq.s32.totalorder %s24, 0
      %p128 = por %p126, %p127
      %s130 = sadd.s32 %s129, 1
      %p133 = scmp.eq.s32.totalorder %s18, 7
      %p134 = scmp.ne.s32.totalorder %s129, %s131
      %p135 = scmp.eq.s32.totalorder %s18, 0
      %p136 = por %p134, %p135
      %p137 = scmp.ne.s32.totalorder %s129, %s131
      %p138 = scmp.eq.s32.totalorder %s23, 7
      %p139 = por %p137, %p138
      %p140 = scmp.ne.s32.totalorder %s131, %s132
      %p141 = scmp.eq.s32.totalorder %s23, 0
      %p142 = por %p140, %p141
      %p143 = scmp.ne.s32.totalorder %s131, %s132
      %p144 = scmp.eq.s32.totalorder %s24, 7
      %p145 = por %p143, %p144
      %p147 = scmp.ne.s32.totalorder %s132, %s146
      %p148 = scmp.eq.s32.totalorder %s24, 0
      %p149 = por %p147, %p148
      %s151 = sadd.s32 %s150, 1
      %p154 = scmp.eq.s32.totalorder %s18, 7
      %p155 = scmp.ne.s32.totalorder %s150, %s152
      %p156 = scmp.eq.s32.totalorder %s18, 0
      %p157 = por %p155, %p156
      %p158 = scmp.ne.s32.totalorder %s150, %s152
      %p159 = scmp.eq.s32.totalorder %s23, 7
      %p160 = por %p158, %p159
      %p161 = scmp.ne.s32.totalorder %s152, %s153
      %p162 = scmp.eq.s32.totalorder %s23, 0
      %p163 = por %p161, %p162
      %p164 = scmp.ne.s32.totalorder %s152, %s153
      %p165 = scmp.eq.s32.totalorder %s24, 7
      %p166 = por %p164, %p165
      %p168 = scmp.ne.s32.totalorder %s153, %s167
      %p169 = scmp.eq.s32.totalorder %s24, 0
      %p170 = por %p168, %p169
      %s172 = sadd.s32 %s171, 1
      %p175 = scmp.eq.s32.totalorder %s18, 7
      %p176 = scmp.ne.s32.totalorder %s171, %s173
      %p177 = scmp.eq.s32.totalorder %s18, 0
      %p178 = por %p176, %p177
      %p179 = scmp.ne.s32.totalorder %s171, %s173
      %p180 = scmp.eq.s32.totalorder %s23, 7
      %p181 = por %p179, %p180
      %p182 = scmp.ne.s32.totalorder %s173, %s174
      %p183 = scmp.eq.s32.totalorder %s23, 0
      %p184 = por %p182, %p183
      %p185 = scmp.ne.s32.totalorder %s173, %s174
      %p186 = scmp.eq.s32.totalorder %s24, 7
      %p187 = por %p185, %p186
      %p189 = scmp.ne.s32.totalorder %s174, %s188
      %p190 = scmp.eq.s32.totalorder %s24, 0
      %p191 = por %p189, %p190
      %s193 = sadd.s32 %s192, 1
      %p196 = scmp.eq.s32.totalorder %s18, 7
      %p197 = scmp.ne.s32.totalorder %s192, %s194
      %p198 = scmp.eq.s32.totalorder %s18, 0
      %p199 = por %p197, %p198
      %p200 = scmp.ne.s32.totalorder %s192, %s194
      %p201 = scmp.eq.s32.totalorder %s23, 7
      %p202 = por %p200, %p201
      %p203 = scmp.ne.s32.totalorder %s194, %s195
      %p204 = scmp.eq.s32.totalorder %s23, 0
      %p205 = por %p203, %p204
      %p206 = scmp.ne.s32.totalorder %s194, %s195
      %p207 = scmp.eq.s32.totalorder %s24, 7
      %p208 = por %p206, %p207
      %p210 = scmp.ne.s32.totalorder %s195, %s209
      %p211 = scmp.eq.s32.totalorder %s24, 0
      %p212 = por %p210, %p211
      %s214 = sadd.s32 %s213, 1
      %p217 = scmp.eq.s32.totalorder %s18, 7
      %p218 = scmp.ne.s32.totalorder %s213, %s215
      %p219 = scmp.eq.s32.totalorder %s18, 0
      %p220 = por %p218, %p219
      %p221 = scmp.ne.s32.totalorder %s213, %s215
      %p222 = scmp.eq.s32.totalorder %s23, 7
      %p223 = por %p221, %p222
      %p224 = scmp.ne.s32.totalorder %s215, %s216
      %p225 = scmp.eq.s32.totalorder %s23, 0
      %p226 = por %p224, %p225
      %p227 = scmp.ne.s32.totalorder %s215, %s216
      %p228 = scmp.eq.s32.totalorder %s24, 7
      %p229 = por %p227, %p228
      %p231 = scmp.ne.s32.totalorder %s216, %s230
      %p232 = scmp.eq.s32.totalorder %s24, 0
      %p233 = por %p231, %p232
      %s234 = ssub.s32 %s25, %s37
      %p235 = scmp.eq.s32.totalorder %s234, 0
      %s237 = sadd.s32 %s236, 1
      %s238 = scalar_select %p235, %s236, %s237
      %p241 = pneg %p235
      %p242 = scmp.eq.s32.totalorder %s18, 7
      %p243 = por %p241, %p242
      %p244 = scmp.ne.s32.totalorder %s236, %s239
      %p245 = scmp.eq.s32.totalorder %s18, 0
      %p246 = por %p244, %p245
      %p247 = scmp.ne.s32.totalorder %s236, %s239
      %p248 = scmp.eq.s32.totalorder %s23, 7
      %p249 = por %p247, %p248
      %p250 = scmp.ne.s32.totalorder %s239, %s240
      %p251 = scmp.eq.s32.totalorder %s23, 0
      %p252 = por %p250, %p251
      %p253 = scmp.ne.s32.totalorder %s239, %s240
      %p254 = scmp.eq.s32.totalorder %s24, 7
      %p255 = por %p253, %p254
      %p257 = scmp.ne.s32.totalorder %s240, %s256
      %p258 = scmp.eq.s32.totalorder %s24, 0
      %p259 = por %p257, %p258
      %p260 = scmp.le.s32.totalorder 1, %s18
      %p261 = scmp.lt.s32.totalorder %s18, 9
      %p262 = pnand %p260, %p261
      %p263 = pneg %p262
      // Predicated region
      $region9: #{moco_forward.2} parent=5 // pred_check
        _
      $region10: #{moco_forward.2} parent=5 // pred_check_branch
        %265 = sbr.rel (%p262) target = $region12
      $region11: #{moco_forward.2} parent=5 // pred_region
        %s266 = ssub.s32 %s18, 1
        // Predicated region
        $region13: #{moco_forward.2} parent=11 // pred_check
          %p267 = pneg %p79
        $region14: #{moco_forward.2} parent=11 // pred_check_branch
          %269 = sbr.rel (%p267) target = $region16
        $region15: #{moco_forward.2} parent=11 // pred_region
          _
        $region16: #{moco_forward.2} parent=11 // pred_fallthru
          _
        // Predicated region
        $region17: #{moco_forward.2} parent=11 // pred_check
          %p270 = pneg %p100
        $region18: #{moco_forward.2} parent=11 // pred_check_branch
          %272 = sbr.rel (%p270) target = $region20
        $region19: #{moco_forward.2} parent=11 // pred_region
          _
        $region20: #{moco_forward.2} parent=11 // pred_fallthru
          _
        // Predicated region
        $region21: #{moco_forward.2} parent=11 // pred_check
          %p273 = pneg %p121
        $region22: #{moco_forward.2} parent=11 // pred_check_branch
          %275 = sbr.rel (%p273) target = $region24
        $region23: #{moco_forward.2} parent=11 // pred_region
          _
        $region24: #{moco_forward.2} parent=11 // pred_fallthru
          _
        // Predicated region
        $region25: #{moco_forward.2} parent=11 // pred_check
          %p276 = pneg %p142
        $region26: #{moco_forward.2} parent=11 // pred_check_branch
          %278 = sbr.rel (%p276) target = $region28
        $region27: #{moco_forward.2} parent=11 // pred_region
          %s280 = ssub.s32 16, 16
          %281 = vsyncadd [#allocation4], %s280
          %s283 = sshll.u32 [#allocation3], 4
          %s284 = int_to_ptr.vmem [resolvable:$true] %s283
          %286 = dma.hbm_to_vmem [thread:$0]  %s4, 16, %s284, [#allocation4]
        $region28: #{moco_forward.2} parent=11 // pred_fallthru
          _
        // Predicated region
        $region29: #{moco_forward.2} parent=11 // pred_check
          %p287 = pneg %p163
        $region30: #{moco_forward.2} parent=11 // pred_check_branch
          %289 = sbr.rel (%p287) target = $region32
        $region31: #{moco_forward.2} parent=11 // pred_region
          %s291 = ssub.s32 512, 512
          %292 = vsyncadd [#allocation6], %s291
          %s293 = sshll.u32 [#allocation5], 4
          %s294 = int_to_ptr.vmem [resolvable:$true] %s293
          %299 = dma.hbm_to_vmem [thread:$0]  %s5, 512, %s294, [#allocation6], 128, 128, 8
        $region32: #{moco_forward.2} parent=11 // pred_fallthru
          _
        // Predicated region
        $region33: #{moco_forward.2} parent=11 // pred_check
          %p300 = pneg %p184
        $region34: #{moco_forward.2} parent=11 // pred_check_branch
          %302 = sbr.rel (%p300) target = $region36
        $region35: #{moco_forward.2} parent=11 // pred_region
          %s304 = ssub.s32 16, 16
          %305 = vsyncadd [#allocation6], %s304
          %s307 = sshll.u32 [#allocation7], 4
          %s308 = int_to_ptr.vmem [resolvable:$true] %s307
          %310 = dma.hbm_to_vmem [thread:$0]  %s6, 16, %s308, [#allocation6]
        $region36: #{moco_forward.2} parent=11 // pred_fallthru
          _
        // Predicated region
        $region37: #{moco_forward.2} parent=11 // pred_check
          %p311 = pneg %p205
        $region38: #{moco_forward.2} parent=11 // pred_check_branch
          %313 = sbr.rel (%p311) target = $region40
        $region39: #{moco_forward.2} parent=11 // pred_region
          _
        $region40: #{moco_forward.2} parent=11 // pred_fallthru
          _
        // Predicated region
        $region41: #{moco_forward.2} parent=11 // pred_check
          %p314 = pneg %p226
        $region42: #{moco_forward.2} parent=11 // pred_check_branch
          %316 = sbr.rel (%p314) target = $region44
        $region43: #{moco_forward.2} parent=11 // pred_region
          %s318 = ssub.s32 2048, 2048
          %319 = vsyncadd [#allocation9], %s318
          %s320 = sshll.u32 [#allocation8], 4
          %s321 = int_to_ptr.vmem [resolvable:$true] %s320
          %326 = dma.hbm_to_vmem [thread:$0]  %s8, 2048, %s321, [#allocation9], 128, 128, 8
        $region44: #{moco_forward.2} parent=11 // pred_fallthru
          _
      $region12: #{moco_forward.2} parent=5 // pred_fallthru
        _
      %p327 = scmp.lt.s32.totalorder %s18, 8
      // Predicated region
      $region45: #{moco_forward.2} parent=5 // pred_check
        %p328 = pneg %p327
      $region46: #{moco_forward.2} parent=5 // pred_check_branch
        %330 = sbr.rel (%p328) target = $region48
      $region47: #{moco_forward.2} parent=5 // pred_region
        // Predicated region
        $region49: #{moco_forward.2} parent=47 // pred_check
          %p331 = pneg %p52
        $region50: #{moco_forward.2} parent=47 // pred_check_branch
          %333 = sbr.rel (%p331) target = $region52
        $region51: #{moco_forward.2} parent=47 // pred_region
          %s334 = smul.u32 2, %s26
          %p335 = scmp.lt.s32.totalorder %s25, 7
          %s336 = scalar_select %p335, %s25, 7
          %p337 = scmp.lt.s32.totalorder %s334, 1
          %s338 = scalar_select %p337, %s334, 1
          %s339 = smul.addr %s336, 2
          %s340 = sadd.s32 %s338, %s339
          %s341 = smul.addr %s340, 4
          %s342 = scalar_lea.vmem %s0, %s341
          %s343 = smul.u32 2, %s26
        $region52: #{moco_forward.2} parent=47 // pred_fallthru
          _
      $region48: #{moco_forward.2} parent=5 // pred_fallthru
        _
      %p344 = scmp.le.s32.totalorder 1, %s18
      %p345 = scmp.lt.s32.totalorder %s18, 9
      %p346 = pnand %p344, %p345
      %p347 = pneg %p346
      // Predicated region
      $region53: #{moco_forward.2} parent=5 // pred_check
        _
      $region54: #{moco_forward.2} parent=5 // pred_check_branch
        %349 = sbr.rel (%p346) target = $region56
      $region55: #{moco_forward.2} parent=5 // pred_region
        %s350 = ssub.s32 %s18, 1
        // Predicated region
        $region57: #{moco_forward.2} parent=55 // pred_check
          %p351 = pneg %p142
        $region58: #{moco_forward.2} parent=55 // pred_check_branch
          %353 = sbr.rel (%p351) target = $region60
        $region59: #{moco_forward.2} parent=55 // pred_region
          %354 = dma.done [#allocation4], 16
        $region60: #{moco_forward.2} parent=55 // pred_fallthru
          _
        // Predicated region
        $region61: #{moco_forward.2} parent=55 // pred_check
          %p355 = pneg %p163
        $region62: #{moco_forward.2} parent=55 // pred_check_branch
          %357 = sbr.rel (%p355) target = $region64
        $region63: #{moco_forward.2} parent=55 // pred_region
          %358 = dma.done [#allocation6], 512
        $region64: #{moco_forward.2} parent=55 // pred_fallthru
          _
        // Predicated region
        $region65: #{moco_forward.2} parent=55 // pred_check
          %p359 = pneg %p184
        $region66: #{moco_forward.2} parent=55 // pred_check_branch
          %361 = sbr.rel (%p359) target = $region68
        $region67: #{moco_forward.2} parent=55 // pred_region
          %362 = dma.done [#allocation6], 16
        $region68: #{moco_forward.2} parent=55 // pred_fallthru
          _
        // Predicated region
        $region69: #{moco_forward.2} parent=55 // pred_check
          %p363 = pneg %p226
        $region70: #{moco_forward.2} parent=55 // pred_check_branch
          %365 = sbr.rel (%p363) target = $region72
        $region71: #{moco_forward.2} parent=55 // pred_region
          %366 = dma.done [#allocation9], 2048
        $region72: #{moco_forward.2} parent=55 // pred_fallthru
          _
        %s367 = smul.u32 2, %s28
        %p368 = scmp.lt.s32.totalorder %s27, 7
        %s369 = scalar_select %p368, %s27, 7
        %p370 = scmp.lt.s32.totalorder %s367, 1
        %s371 = scalar_select %p370, %s367, 1
        %s372 = smul.addr %s369, 2
        %s373 = sadd.s32 %s371, %s372
        %s374 = smul.addr %s373, 4
        %s375 = scalar_lea.vmem %s0, %s374
        %p376 = pneg %p58
        %p377 = pneg %p55
        %p378 = pneg %p79
        %p379 = pneg %p76
        %p380 = pneg %p100
        %p381 = pneg %p97
        %p382 = pneg %p121
        %p383 = pneg %p118
        %p384 = pneg %p142
        %p385 = pneg %p139
        %p386 = pneg %p163
        %p387 = pneg %p160
        %p388 = pneg %p184
        %p389 = pneg %p181
        %p390 = pneg %p205
        %p391 = pneg %p202
        %p392 = pneg %p226
        %p393 = pneg %p223
        %p394 = pneg %p252
        %p395 = pneg %p249
        %p396 = scmp.lt.s32.totalorder %s27, 7
        %s397 = scalar_select %p396, %s27, 7
        %s398 = scalar_lea.vmem %s9, %s397
        %s399 = smul.u32 2, %s28
        %p400 = scmp.lt.s32.totalorder %s27, 7
        %s401 = scalar_select %p400, %s27, 7
        %p402 = scmp.lt.s32.totalorder %s399, 1
        %s403 = scalar_select %p402, %s399, 1
        %s404 = smul.addr %s401, 2
        %s405 = sadd.s32 %s403, %s404
        %s406 = smul.addr %s405, 4
        %s407 = scalar_lea.vmem %s0, %s406
        %s408 = smul.u32 2, %s28
        %p409 = scmp.lt.s32.totalorder %s27, 7
        %s410 = scalar_select %p409, %s27, 7
        %s411 = scalar_lea.vmem %s9, %s410
        %p412 = scmp.eq.s32.totalorder %s28, 0
        // Predicated region
        $region73: #{moco_forward.2} parent=55 // pred_check
          %p413 = pneg %p412
        $region74: #{moco_forward.2} parent=55 // pred_check_branch
          %415 = sbr.rel (%p413) target = $region76
        $region75: #{moco_forward.2} parent=55 // pred_region
          %416 = vst [vmem:[%s411] sm:$0x1] 0.0
        $region76: #{moco_forward.2} parent=55 // pred_fallthru
          _
        %v417 = vld [vmem:[%s407] sm:$0xff]
        %v418 = vld [vmem:[%s1] sm:$0xff]
        %v419 = vld [vmem:[%s1 + $0x8] sm:$0xff]
        %v420 = vld [vmem:[%s1 + $0x10] sm:$0xff]
        %v421 = vld [vmem:[%s1 + $0x18] sm:$0xff]
        %v422 = vld [vmem:[%s2] sm:$0xff]
        %v423 = vld [vmem:[%s2 + $0x8] sm:$0xff]
        %v424 = vld [vmem:[%s2 + $0x10] sm:$0xff]
        %v425 = vld [vmem:[%s2 + $0x18] sm:$0xff]
        %427 = vset.pattern.permute.xlu0 0
        %428 = vperm.xlu0 %427, %v422
        %v429 = vpop.permute.xlu0 %428
        %432 = vset.pattern.permute.xlu0 0
        %433 = vperm.xlu0 %432, %v423
        %v434 = vpop.permute.xlu0 %433
        %437 = vset.pattern.permute.xlu0 0
        %438 = vperm.xlu0 %437, %v424
        %v439 = vpop.permute.xlu0 %438
        %442 = vset.pattern.permute.xlu0 0
        %443 = vperm.xlu0 %442, %v425
        %v444 = vpop.permute.xlu0 %443
        %v447 = vcombine.high %v417, %v417
        %vm448 = vcmask 31744
        %v450 = vsel %vm448, %v418, 0
        %v453 = vsel %vm448, %v419, 0
        %v456 = vsel %vm448, %v420, 0
        %v459 = vsel %vm448, %v421, 0
        %vm461 = vcmask 1043456
        %v462 = vsel %vm461, %v417, 0
        %v464 = vsel %vm461, %v447, 0
        %466 = vmatprep.subr.mxu0 %v464
        %467 = vmatpush1.msra.mxu0 %v462
        %468 = vmatprep.subr.mxu0 0.0
        %469 = vmatpush1.msra.mxu0 0.0
        %470 = vmatprep.subr.mxu0 0.0
        %471 = vmatpush1.msra.mxu0 0.0
        %472 = vmatprep.subr.mxu0 0.0
        %473 = vmatpush1.msra.mxu0 0.0
        %474 = vmatprep.subr.mxu0 0.0
        %475 = vmatpush1.msra.mxu0 0.0
        %476 = vmatprep.subr.mxu0 0.0
        %477 = vmatpush1.msra.mxu0 0.0
        %478 = vmatprep.subr.mxu0 0.0
        %479 = vmatpush1.msra.mxu0 0.0
        %480 = vmatprep.subr.mxu0 0.0
        %481 = vmatpush1.msra.mxu0 0.0
        %482 = vmatprep.subr.mxu0 0.0
        %483 = vmatpush1.msra.mxu0 0.0
        %484 = vmatprep.subr.mxu0 0.0
        %485 = vmatpush1.msra.mxu0 0.0
        %486 = vmatprep.subr.mxu0 0.0
        %487 = vmatpush1.msra.mxu0 0.0
        %488 = vmatprep.subr.mxu0 0.0
        %489 = vmatpush1.msra.mxu0 0.0
        %490 = vmatprep.subr.mxu0 0.0
        %491 = vmatpush1.msra.mxu0 0.0
        %492 = vmatprep.subr.mxu0 0.0
        %493 = vmatpush1.msra.mxu0 0.0
        %494 = vmatprep.subr.mxu0 0.0
        %495 = vmatpush1.msra.mxu0 0.0
        %496 = vmatprep.subr.mxu0 0.0
        %497 = vmatpush1.msra.mxu0 0.0
        %498 = vmatprep.subr.mxu0 0.0
        %499 = vmatpush1.msra.mxu0 0.0
        %500 = vmatprep.subr.mxu0 0.0
        %501 = vmatpush1.msra.mxu0 0.0
        %502 = vmatprep.subr.mxu0 0.0
        %503 = vmatpush1.msra.mxu0 0.0
        %504 = vmatprep.subr.mxu0 0.0
        %505 = vmatpush1.msra.mxu0 0.0
        %506 = vmatprep.subr.mxu0 0.0
        %507 = vmatpush1.msra.mxu0 0.0
        %508 = vmatprep.subr.mxu0 0.0
        %509 = vmatpush1.msra.mxu0 0.0
        %510 = vmatprep.subr.mxu0 0.0
        %511 = vmatpush1.msra.mxu0 0.0
        %512 = vmatprep.subr.mxu0 0.0
        %513 = vmatpush1.msra.mxu0 0.0
        %514 = vmatprep.subr.mxu0 0.0
        %515 = vmatpush1.msra.mxu0 0.0
        %516 = vmatprep.subr.mxu0 0.0
        %517 = vmatpush1.msra.mxu0 0.0
        %518 = vmatprep.subr.mxu0 0.0
        %519 = vmatpush1.msra.mxu0 0.0
        %520 = vmatprep.subr.mxu0 0.0
        %521 = vmatpush1.msra.mxu0 0.0
        %522 = vmatprep.subr.mxu0 0.0
        %523 = vmatpush1.msra.mxu0 0.0
        %524 = vmatprep.subr.mxu0 0.0
        %525 = vmatpush1.msra.mxu0 0.0
        %526 = vmatprep.subr.mxu0 0.0
        %527 = vmatpush1.msra.mxu0 0.0
        %528 = vmatprep.subr.mxu0 0.0
        %529 = vmatpush1.msra.mxu0 0.0
        %530 = vmatprep.mubr.f32.mxu0 0.0
        %531 = vmatmul.mubr.f32.gmra.mrb[0].mxu0 %v450
        %v532 = vpop.f32.mrb[0].mxu0
        %v533 = vadd.f32 %v429, %v532
        %v534 = vpop.f32.mrb[0].mxu0
        %v535 = vadd.f32 %v429, %v534
        %536 = vmatprep.mubr.f32.mxu0 0.0
        %537 = vmatmul.mubr.f32.gmra.mrb[0].mxu0 %v453
        %v538 = vpop.f32.mrb[0].mxu0
        %v539 = vadd.f32 %v434, %v538
        %v540 = vpop.f32.mrb[0].mxu0
        %v541 = vadd.f32 %v434, %v540
        %542 = vmatprep.mubr.f32.mxu0 0.0
        %543 = vmatmul.mubr.f32.gmra.mrb[0].mxu0 %v456
        %v544 = vpop.f32.mrb[0].mxu0
        %v545 = vadd.f32 %v439, %v544
        %v546 = vpop.f32.mrb[0].mxu0
        %v547 = vadd.f32 %v439, %v546
        %548 = vmatprep.mubr.f32.mxu0 0.0
        %549 = vmatmul.mubr.f32.gmra.mrb[0].mxu0 %v459
        %v550 = vpop.f32.mrb[0].mxu0
        %v551 = vadd.f32 %v444, %v550
        %v552 = vpop.f32.mrb[0].mxu0
        %v553 = vadd.f32 %v444, %v552
        %554 = vdwg.mxu0
        %v555 = vmax.f32 %v533, 0.0
        %v556 = vmax.f32 %v535, 0.0
        %v557 = vmax.f32 %v539, 0.0
        %v558 = vmax.f32 %v541, 0.0
        %v559 = vmax.f32 %v545, 0.0
        %v560 = vmax.f32 %v547, 0.0
        %v561 = vmax.f32 %v551, 0.0
        %v562 = vmax.f32 %v553, 0.0
        %v563 = vadd.f32 %v555, %v556
        %v564 = vadd.f32 %v557, %v558
        %v565 = vadd.f32 %v559, %v560
        %v566 = vadd.f32 %v561, %v562
        // Predicated region
        $region77: #{moco_forward.2} parent=55 // pred_check
          %p567 = pneg %p412
        $region78: #{moco_forward.2} parent=55 // pred_check_branch
          %569 = sbr.rel (%p567) target = $region80
        $region79: #{moco_forward.2} parent=55 // pred_region
          %570 = vst [vmem:[#allocation2] sm:$0xff] %v563
          %571 = vst [vmem:[#allocation2 + $0x8] sm:$0xff] %v564
          %572 = vst [vmem:[#allocation2 + $0x10] sm:$0xff] %v565
          %573 = vst [vmem:[#allocation2 + $0x18] sm:$0xff] %v566
        $region80: #{moco_forward.2} parent=55 // pred_fallthru
          _
        %p574 = scmp.ne.s32.totalorder %s28, 0
        // Predicated region
        $region81: #{moco_forward.2} parent=55 // pred_check
          %p575 = pneg %p574
        $region82: #{moco_forward.2} parent=55 // pred_check_branch
          %577 = sbr.rel (%p575) target = $region84
        $region83: #{moco_forward.2} parent=55 // pred_region
          %v578 = vld [vmem:[#allocation2] sm:$0xff]
          %v579 = vld [vmem:[#allocation2 + $0x8] sm:$0xff]
          %v580 = vld [vmem:[#allocation2 + $0x10] sm:$0xff]
          %v581 = vld [vmem:[#allocation2 + $0x18] sm:$0xff]
          %v582 = vadd.f32 %v578, %v563
          %v583 = vadd.f32 %v579, %v564
          %v584 = vadd.f32 %v580, %v565
          %v585 = vadd.f32 %v581, %v566
          %586 = vst [vmem:[#allocation2] sm:$0xff] %v582
          %587 = vst [vmem:[#allocation2 + $0x8] sm:$0xff] %v583
          %588 = vst [vmem:[#allocation2 + $0x10] sm:$0xff] %v584
          %589 = vst [vmem:[#allocation2 + $0x18] sm:$0xff] %v585
        $region84: #{moco_forward.2} parent=55 // pred_fallthru
          _
        // Predicated region
        $region85: #{moco_forward.2} parent=55 // pred_check
          %p590 = pneg %p412
        $region86: #{moco_forward.2} parent=55 // pred_check_branch
          %592 = sbr.rel (%p590) target = $region88
        $region87: #{moco_forward.2} parent=55 // pred_region
          %v593 = vld [vmem:[#allocation2] sm:$0xff]
          %v594 = vld [vmem:[#allocation2 + $0x8] sm:$0xff]
          %v595 = vld [vmem:[#allocation2 + $0x10] sm:$0xff]
          %v596 = vld [vmem:[#allocation2 + $0x18] sm:$0xff]
          %597 = vadd.xlane.f32.xlu0 %v593
          %v598 = vpop.xlane.xlu0 %597
          %599 = vadd.xlane.f32.xlu0 %v594
          %v600 = vpop.xlane.xlu0 %599
          %601 = vadd.xlane.f32.xlu0 %v595
          %v602 = vpop.xlane.xlu0 %601
          %603 = vadd.xlane.f32.xlu0 %v596
          %v604 = vpop.xlane.xlu0 %603
          %605 = vxpose.xlu0.b32.start [1/16] %v598, 128
          %606 = vxpose.xlu0.b32.cont [2/16] %v600, 128
          %607 = vxpose.xlu0.b32.cont [3/16] %v602, 128
          %608 = vxpose.xlu0.b32.cont [4/16] %v604, 128
          %609 = vxpose.xlu0.b32.cont [5/16] 0.0, 128
          %610 = vxpose.xlu0.b32.cont [6/16] 0.0, 128
          %611 = vxpose.xlu0.b32.cont [7/16] 0.0, 128
          %612 = vxpose.xlu0.b32.cont [8/16] 0.0, 128
          %613 = vxpose.xlu0.b32.cont [9/16] 0.0, 128
          %614 = vxpose.xlu0.b32.cont [10/16] 0.0, 128
          %615 = vxpose.xlu0.b32.cont [11/16] 0.0, 128
          %616 = vxpose.xlu0.b32.cont [12/16] 0.0, 128
          %617 = vxpose.xlu0.b32.cont [13/16] 0.0, 128
          %618 = vxpose.xlu0.b32.cont [14/16] 0.0, 128
          %619 = vxpose.xlu0.b32.cont [15/16] 0.0, 128
          %620 = vxpose.xlu0.b32.end [16/16] 0.0, 128
          %v621 = vpop.trf.xlu0
          %v622 = vpop.trf.xlu0
          %v623 = vpop.trf.xlu0
          %v624 = vpop.trf.xlu0
          %v625 = vpop.trf.xlu0
          %v626 = vpop.trf.xlu0
          %v627 = vpop.trf.xlu0
          %v628 = vpop.trf.xlu0
          %v629 = vpop.trf.xlu0
          %v630 = vpop.trf.xlu0
          %v631 = vpop.trf.xlu0
          %v632 = vpop.trf.xlu0
          %v633 = vpop.trf.xlu0
          %v634 = vpop.trf.xlu0
          %v635 = vpop.trf.xlu0
          %v636 = vpop.trf.xlu0
          %v637 = vld [vmem:[%s3] sm:$0xff]
          %v638 = vld [vmem:[%s3 + $0x8] sm:$0xff]
          %v639 = vld [vmem:[%s3 + $0x10] sm:$0xff]
          %v640 = vld [vmem:[%s3 + $0x18] sm:$0xff]
          %v641 = vld [vmem:[#allocation3] sm:$0x1]
          %vm642 = vcmask 261120
          %v644 = vsel %vm642, %v621, 0
          %646 = vmatprep.subr.mxu0 0.0
          %647 = vmatpush1.msra.mxu0 %v637
          %648 = vmatprep.subr.mxu0 0.0
          %649 = vmatpush1.msra.mxu0 %v638
          %650 = vmatprep.subr.mxu0 0.0
          %651 = vmatpush1.msra.mxu0 %v639
          %652 = vmatprep.subr.mxu0 0.0
          %653 = vmatpush1.msra.mxu0 %v640
          %654 = vmatprep.subr.mxu0 0.0
          %655 = vmatpush1.msra.mxu0 0.0
          %656 = vmatprep.subr.mxu0 0.0
          %657 = vmatpush1.msra.mxu0 0.0
          %658 = vmatprep.subr.mxu0 0.0
          %659 = vmatpush1.msra.mxu0 0.0
          %660 = vmatprep.subr.mxu0 0.0
          %661 = vmatpush1.msra.mxu0 0.0
          %662 = vmatprep.subr.mxu0 0.0
          %663 = vmatpush1.msra.mxu0 0.0
          %664 = vmatprep.subr.mxu0 0.0
          %665 = vmatpush1.msra.mxu0 0.0
          %666 = vmatprep.subr.mxu0 0.0
          %667 = vmatpush1.msra.mxu0 0.0
          %668 = vmatprep.subr.mxu0 0.0
          %669 = vmatpush1.msra.mxu0 0.0
          %670 = vmatprep.subr.mxu0 0.0
          %671 = vmatpush1.msra.mxu0 0.0
          %672 = vmatprep.subr.mxu0 0.0
          %673 = vmatpush1.msra.mxu0 0.0
          %674 = vmatprep.subr.mxu0 0.0
          %675 = vmatpush1.msra.mxu0 0.0
          %676 = vmatprep.subr.mxu0 0.0
          %677 = vmatpush1.msra.mxu0 0.0
          %678 = vmatprep.subr.mxu0 0.0
          %679 = vmatpush1.msra.mxu0 0.0
          %680 = vmatprep.subr.mxu0 0.0
          %681 = vmatpush1.msra.mxu0 0.0
          %682 = vmatprep.subr.mxu0 0.0
          %683 = vmatpush1.msra.mxu0 0.0
          %684 = vmatprep.subr.mxu0 0.0
          %685 = vmatpush1.msra.mxu0 0.0
          %686 = vmatprep.subr.mxu0 0.0
          %687 = vmatpush1.msra.mxu0 0.0
          %688 = vmatprep.subr.mxu0 0.0
          %689 = vmatpush1.msra.mxu0 0.0
          %690 = vmatprep.subr.mxu0 0.0
          %691 = vmatpush1.msra.mxu0 0.0
          %692 = vmatprep.subr.mxu0 0.0
          %693 = vmatpush1.msra.mxu0 0.0
          %694 = vmatprep.subr.mxu0 0.0
          %695 = vmatpush1.msra.mxu0 0.0
          %696 = vmatprep.subr.mxu0 0.0
          %697 = vmatpush1.msra.mxu0 0.0
          %698 = vmatprep.subr.mxu0 0.0
          %699 = vmatpush1.msra.mxu0 0.0
          %700 = vmatprep.subr.mxu0 0.0
          %701 = vmatpush1.msra.mxu0 0.0
          %702 = vmatprep.subr.mxu0 0.0
          %703 = vmatpush1.msra.mxu0 0.0
          %704 = vmatprep.subr.mxu0 0.0
          %705 = vmatpush1.msra.mxu0 0.0
          %706 = vmatprep.subr.mxu0 0.0
          %707 = vmatpush1.msra.mxu0 0.0
          %708 = vmatprep.subr.mxu0 0.0
          %709 = vmatpush1.msra.mxu0 0.0
          %710 = vmatprep.mubr.f32.mxu0 0.0
          %711 = vmatmul.mubr.f32.gmra.mrb[0].mxu0 %v644
          %v712 = vpop.f32.mrb[0].mxu0
          %v713 = vadd.f32 %v641, %v712
          %v714 = vpop.f32.mrb[0].mxu0
          %715 = vdwg.mxu0
          %v716 = vmax.f32 %v713, 0.0
          %v717 = vld [vmem:[#allocation5] sm:$0xff]
          %v718 = vld [vmem:[#allocation5 + $0x8] sm:$0xff]
          %v719 = vld [vmem:[#allocation5 + $0x10] sm:$0xff]
          %v720 = vld [vmem:[#allocation5 + $0x18] sm:$0xff]
          %v721 = vld [vmem:[#allocation7] sm:$0x1]
          %v723 = vsel %vm642, %v716, 0
          %725 = vmatprep.subr.mxu0 0.0
          %726 = vmatpush1.msra.mxu0 %v717
          %727 = vmatprep.subr.mxu0 0.0
          %728 = vmatpush1.msra.mxu0 %v718
          %729 = vmatprep.subr.mxu0 0.0
          %730 = vmatpush1.msra.mxu0 %v719
          %731 = vmatprep.subr.mxu0 0.0
          %732 = vmatpush1.msra.mxu0 %v720
          %733 = vmatprep.subr.mxu0 0.0
          %734 = vmatpush1.msra.mxu0 0.0
          %735 = vmatprep.subr.mxu0 0.0
          %736 = vmatpush1.msra.mxu0 0.0
          %737 = vmatprep.subr.mxu0 0.0
          %738 = vmatpush1.msra.mxu0 0.0
          %739 = vmatprep.subr.mxu0 0.0
          %740 = vmatpush1.msra.mxu0 0.0
          %741 = vmatprep.subr.mxu0 0.0
          %742 = vmatpush1.msra.mxu0 0.0
          %743 = vmatprep.subr.mxu0 0.0
          %744 = vmatpush1.msra.mxu0 0.0
          %745 = vmatprep.subr.mxu0 0.0
          %746 = vmatpush1.msra.mxu0 0.0
          %747 = vmatprep.subr.mxu0 0.0
          %748 = vmatpush1.msra.mxu0 0.0
          %749 = vmatprep.subr.mxu0 0.0
          %750 = vmatpush1.msra.mxu0 0.0
          %751 = vmatprep.subr.mxu0 0.0
          %752 = vmatpush1.msra.mxu0 0.0
          %753 = vmatprep.subr.mxu0 0.0
          %754 = vmatpush1.msra.mxu0 0.0
          %755 = vmatprep.subr.mxu0 0.0
          %756 = vmatpush1.msra.mxu0 0.0
          %757 = vmatprep.subr.mxu0 0.0
          %758 = vmatpush1.msra.mxu0 0.0
          %759 = vmatprep.subr.mxu0 0.0
          %760 = vmatpush1.msra.mxu0 0.0
          %761 = vmatprep.subr.mxu0 0.0
          %762 = vmatpush1.msra.mxu0 0.0
          %763 = vmatprep.subr.mxu0 0.0
          %764 = vmatpush1.msra.mxu0 0.0
          %765 = vmatprep.subr.mxu0 0.0
          %766 = vmatpush1.msra.mxu0 0.0
          %767 = vmatprep.subr.mxu0 0.0
          %768 = vmatpush1.msra.mxu0 0.0
          %769 = vmatprep.subr.mxu0 0.0
          %770 = vmatpush1.msra.mxu0 0.0
          %771 = vmatprep.subr.mxu0 0.0
          %772 = vmatpush1.msra.mxu0 0.0
          %773 = vmatprep.subr.mxu0 0.0
          %774 = vmatpush1.msra.mxu0 0.0
          %775 = vmatprep.subr.mxu0 0.0
          %776 = vmatpush1.msra.mxu0 0.0
          %777 = vmatprep.subr.mxu0 0.0
          %778 = vmatpush1.msra.mxu0 0.0
          %779 = vmatprep.subr.mxu0 0.0
          %780 = vmatpush1.msra.mxu0 0.0
          %781 = vmatprep.subr.mxu0 0.0
          %782 = vmatpush1.msra.mxu0 0.0
          %783 = vmatprep.subr.mxu0 0.0
          %784 = vmatpush1.msra.mxu0 0.0
          %785 = vmatprep.subr.mxu0 0.0
          %786 = vmatpush1.msra.mxu0 0.0
          %787 = vmatprep.subr.mxu0 0.0
          %788 = vmatpush1.msra.mxu0 0.0
          %789 = vmatprep.mubr.f32.mxu0 0.0
          %790 = vmatmul.mubr.f32.gmra.mrb[0].mxu0 %v723
          %v791 = vpop.f32.mrb[0].mxu0
          %v792 = vadd.f32 %v721, %v791
          %v793 = vpop.f32.mrb[0].mxu0
          %794 = vdwg.mxu0
          %v795 = vmul.f32 %v792, %v792
          %vm796 = vcmask 1040384
          %v797 = vsel %vm796, %v795, 0.0
          %798 = vadd.xlane.f32.xlu0 %v797
          %v799 = vpop.xlane.xlu0 %798
          %v800 = vmax.f32 %v799, 1e-24
          %v801 = vrsqrt.pop %v800
          %v802 = vmul.f32 %v792, %v801
          %v803 = vld [vmem:[%s7] sm:$0xff]
          %v804 = vld [vmem:[%s7 + $0x8] sm:$0xff]
          %v805 = vld [vmem:[%s7 + $0x10] sm:$0xff]
          %v806 = vld [vmem:[%s7 + $0x18] sm:$0xff]
          %v807 = vld [vmem:[%s7 + $0x20] sm:$0xff]
          %v808 = vld [vmem:[%s7 + $0x28] sm:$0xff]
          %v809 = vld [vmem:[%s7 + $0x30] sm:$0xff]
          %v810 = vld [vmem:[%s7 + $0x38] sm:$0xff]
          %v811 = vlaneseq
          %v812 = vshrl.u32 %v811, 7
          %v813 = vsub.s32 0, %v812
          %v814 = vrot.slane %v802, %v813
          %v815 = vsub.f32 %v814, %v803
          %v816 = vsub.f32 %v814, %v804
          %v817 = vsub.f32 %v814, %v805
          %v818 = vsub.f32 %v814, %v806
          %v819 = vsub.f32 %v814, %v807
          %v820 = vsub.f32 %v814, %v808
          %v821 = vsub.f32 %v814, %v809
          %v822 = vsub.f32 %v814, %v810
          %v823 = vld [vmem:[#allocation8] sm:$0xff]
          %v824 = vld [vmem:[#allocation8 + $0x8] sm:$0xff]
          %v825 = vld [vmem:[#allocation8 + $0x10] sm:$0xff]
          %v826 = vld [vmem:[#allocation8 + $0x18] sm:$0xff]
          %v827 = vld [vmem:[#allocation8 + $0x20] sm:$0xff]
          %v828 = vld [vmem:[#allocation8 + $0x28] sm:$0xff]
          %v829 = vld [vmem:[#allocation8 + $0x30] sm:$0xff]
          %v830 = vld [vmem:[#allocation8 + $0x38] sm:$0xff]
          %v831 = vld [vmem:[#allocation8 + $0x40] sm:$0xff]
          %v832 = vld [vmem:[#allocation8 + $0x48] sm:$0xff]
          %v833 = vld [vmem:[#allocation8 + $0x50] sm:$0xff]
          %v834 = vld [vmem:[#allocation8 + $0x58] sm:$0xff]
          %v835 = vld [vmem:[#allocation8 + $0x60] sm:$0xff]
          %v836 = vld [vmem:[#allocation8 + $0x68] sm:$0xff]
          %v837 = vld [vmem:[#allocation8 + $0x70] sm:$0xff]
          %v838 = vld [vmem:[#allocation8 + $0x78] sm:$0xff]
          %839 = vmatprep.subr.mxu0 0.0
          %840 = vmatpush1.msra.mxu0 %v823
          %841 = vmatprep.subr.mxu0 0.0
          %842 = vmatpush1.msra.mxu0 %v824
          %843 = vmatprep.subr.mxu0 0.0
          %844 = vmatpush1.msra.mxu0 %v825
          %845 = vmatprep.subr.mxu0 0.0
          %846 = vmatpush1.msra.mxu0 %v826
          %847 = vmatprep.subr.mxu0 0.0
          %848 = vmatpush1.msra.mxu0 %v827
          %849 = vmatprep.subr.mxu0 0.0
          %850 = vmatpush1.msra.mxu0 %v828
          %851 = vmatprep.subr.mxu0 0.0
          %852 = vmatpush1.msra.mxu0 %v829
          %853 = vmatprep.subr.mxu0 0.0
          %854 = vmatpush1.msra.mxu0 %v830
          %855 = vmatprep.subr.mxu0 0.0
          %856 = vmatpush1.msra.mxu0 %v831
          %857 = vmatprep.subr.mxu0 0.0
          %858 = vmatpush1.msra.mxu0 %v832
          %859 = vmatprep.subr.mxu0 0.0
          %860 = vmatpush1.msra.mxu0 %v833
          %861 = vmatprep.subr.mxu0 0.0
          %862 = vmatpush1.msra.mxu0 %v834
          %863 = vmatprep.subr.mxu0 0.0
          %864 = vmatpush1.msra.mxu0 %v835
          %865 = vmatprep.subr.mxu0 0.0
          %866 = vmatpush1.msra.mxu0 %v836
          %867 = vmatprep.subr.mxu0 0.0
          %868 = vmatpush1.msra.mxu0 %v837
          %869 = vmatprep.subr.mxu0 0.0
          %870 = vmatpush1.msra.mxu0 %v838
          %871 = vmatprep.subr.mxu0 0.0
          %872 = vmatpush1.msra.mxu0 0.0
          %873 = vmatprep.subr.mxu0 0.0
          %874 = vmatpush1.msra.mxu0 0.0
          %875 = vmatprep.subr.mxu0 0.0
          %876 = vmatpush1.msra.mxu0 0.0
          %877 = vmatprep.subr.mxu0 0.0
          %878 = vmatpush1.msra.mxu0 0.0
          %879 = vmatprep.subr.mxu0 0.0
          %880 = vmatpush1.msra.mxu0 0.0
          %881 = vmatprep.subr.mxu0 0.0
          %882 = vmatpush1.msra.mxu0 0.0
          %883 = vmatprep.subr.mxu0 0.0
          %884 = vmatpush1.msra.mxu0 0.0
          %885 = vmatprep.subr.mxu0 0.0
          %886 = vmatpush1.msra.mxu0 0.0
          %887 = vmatprep.subr.mxu0 0.0
          %888 = vmatpush1.msra.mxu0 0.0
          %889 = vmatprep.subr.mxu0 0.0
          %890 = vmatpush1.msra.mxu0 0.0
          %891 = vmatprep.subr.mxu0 0.0
          %892 = vmatpush1.msra.mxu0 0.0
          %893 = vmatprep.subr.mxu0 0.0
          %894 = vmatpush1.msra.mxu0 0.0
          %895 = vmatprep.subr.mxu0 0.0
          %896 = vmatpush1.msra.mxu0 0.0
          %897 = vmatprep.subr.mxu0 0.0
          %898 = vmatpush1.msra.mxu0 0.0
          %899 = vmatprep.subr.mxu0 0.0
          %900 = vmatpush1.msra.mxu0 0.0
          %901 = vmatprep.subr.mxu0 0.0
          %902 = vmatpush1.msra.mxu0 0.0
          %903 = vmatprep.mubr.f32.mxu0 0.0
          %904 = vmatmul.mubr.f32.gmra.mrb[0].mxu0 %v815
          %v905 = vpop.f32.mrb[0].mxu0
          %v906 = vadd.f32 0.0, %v905
          %v907 = vpop.f32.mrb[0].mxu0
          %908 = vmatprep.mubr.f32.mxu0 0.0
          %909 = vmatmul.mubr.f32.gmra.mrb[0].mxu0 %v816
          %v910 = vpop.f32.mrb[0].mxu0
          %v911 = vadd.f32 0.0, %v910
          %v912 = vpop.f32.mrb[0].mxu0
          %913 = vmatprep.mubr.f32.mxu0 0.0
          %914 = vmatmul.mubr.f32.gmra.mrb[0].mxu0 %v817
          %v915 = vpop.f32.mrb[0].mxu0
          %v916 = vadd.f32 0.0, %v915
          %v917 = vpop.f32.mrb[0].mxu0
          %918 = vmatprep.mubr.f32.mxu0 0.0
          %919 = vmatmul.mubr.f32.gmra.mrb[0].mxu0 %v818
          %v920 = vpop.f32.mrb[0].mxu0
          %v921 = vadd.f32 0.0, %v920
          %v922 = vpop.f32.mrb[0].mxu0
          %923 = vmatprep.mubr.f32.mxu0 0.0
          %924 = vmatmul.mubr.f32.gmra.mrb[0].mxu0 %v819
          %v925 = vpop.f32.mrb[0].mxu0
          %v926 = vadd.f32 0.0, %v925
          %v927 = vpop.f32.mrb[0].mxu0
          %928 = vmatprep.mubr.f32.mxu0 0.0
          %929 = vmatmul.mubr.f32.gmra.mrb[0].mxu0 %v820
          %v930 = vpop.f32.mrb[0].mxu0
          %v931 = vadd.f32 0.0, %v930
          %v932 = vpop.f32.mrb[0].mxu0
          %933 = vmatprep.mubr.f32.mxu0 0.0
          %934 = vmatmul.mubr.f32.gmra.mrb[0].mxu0 %v821
          %v935 = vpop.f32.mrb[0].mxu0
          %v936 = vadd.f32 0.0, %v935
          %v937 = vpop.f32.mrb[0].mxu0
          %938 = vmatprep.mubr.f32.mxu0 0.0
          %939 = vmatmul.mubr.f32.gmra.mrb[0].mxu0 %v822
          %v940 = vpop.f32.mrb[0].mxu0
          %v941 = vadd.f32 0.0, %v940
          %v942 = vpop.f32.mrb[0].mxu0
          %943 = vdwg.mxu0
          %v944 = vmul.f32 %v906, %v815
          %v945 = vmul.f32 %v911, %v816
          %v946 = vmul.f32 %v916, %v817
          %v947 = vmul.f32 %v921, %v818
          %v948 = vmul.f32 %v926, %v819
          %v949 = vmul.f32 %v931, %v820
          %v950 = vmul.f32 %v936, %v821
          %v951 = vmul.f32 %v941, %v822
          %952 = vadd.xlane.f32.xlu0 %v944
          %v953 = vpop.xlane.xlu0 %952
          %954 = vadd.xlane.f32.xlu0 %v945
          %v955 = vpop.xlane.xlu0 %954
          %956 = vadd.xlane.f32.xlu0 %v946
          %v957 = vpop.xlane.xlu0 %956
          %958 = vadd.xlane.f32.xlu0 %v947
          %v959 = vpop.xlane.xlu0 %958
          %960 = vadd.xlane.f32.xlu0 %v948
          %v961 = vpop.xlane.xlu0 %960
          %962 = vadd.xlane.f32.xlu0 %v949
          %v963 = vpop.xlane.xlu0 %962
          %964 = vadd.xlane.f32.xlu0 %v950
          %v965 = vpop.xlane.xlu0 %964
          %966 = vadd.xlane.f32.xlu0 %v951
          %v967 = vpop.xlane.xlu0 %966
          %v968 = vmax.f32 %v953, 0.0
          %v969 = vmax.f32 %v955, 0.0
          %v970 = vmax.f32 %v957, 0.0
          %v971 = vmax.f32 %v959, 0.0
          %v972 = vmax.f32 %v961, 0.0
          %v973 = vmax.f32 %v963, 0.0
          %v974 = vmax.f32 %v965, 0.0
          %v975 = vmax.f32 %v967, 0.0
          %v976 = vrsqrt.pop %v968
          %v977 = vmul.f32 %v968, %v976
          %vm978 = vcmp.eq.f32.partialorder %v968, inf
          %v979 = vsel %vm978, %v968, %v977
          %vm980 = vcmp.eq.f32.partialorder %v968, 0.0
          %v981 = vand.u32 %v968, 2147483648
          %v982 = vsel %vm980, %v981, %v979
          %v983 = vrsqrt.pop %v969
          %v984 = vmul.f32 %v969, %v983
          %vm985 = vcmp.eq.f32.partialorder %v969, inf
          %v986 = vsel %vm985, %v969, %v984
          %vm987 = vcmp.eq.f32.partialorder %v969, 0.0
          %v988 = vand.u32 %v969, 2147483648
          %v989 = vsel %vm987, %v988, %v986
          %v990 = vrsqrt.pop %v970
          %v991 = vmul.f32 %v970, %v990
          %vm992 = vcmp.eq.f32.partialorder %v970, inf
          %v993 = vsel %vm992, %v970, %v991
          %vm994 = vcmp.eq.f32.partialorder %v970, 0.0
          %v995 = vand.u32 %v970, 2147483648
          %v996 = vsel %vm994, %v995, %v993
          %v997 = vrsqrt.pop %v971
          %v998 = vmul.f32 %v971, %v997
          %vm999 = vcmp.eq.f32.partialorder %v971, inf
          %v1000 = vsel %vm999, %v971, %v998
          %vm1001 = vcmp.eq.f32.partialorder %v971, 0.0
          %v1002 = vand.u32 %v971, 2147483648
          %v1003 = vsel %vm1001, %v1002, %v1000
          %v1004 = vrsqrt.pop %v972
          %v1005 = vmul.f32 %v972, %v1004
          %vm1006 = vcmp.eq.f32.partialorder %v972, inf
          %v1007 = vsel %vm1006, %v972, %v1005
          %vm1008 = vcmp.eq.f32.partialorder %v972, 0.0
          %v1009 = vand.u32 %v972, 2147483648
          %v1010 = vsel %vm1008, %v1009, %v1007
          %v1011 = vrsqrt.pop %v973
          %v1012 = vmul.f32 %v973, %v1011
          %vm1013 = vcmp.eq.f32.partialorder %v973, inf
          %v1014 = vsel %vm1013, %v973, %v1012
          %vm1015 = vcmp.eq.f32.partialorder %v973, 0.0
          %v1016 = vand.u32 %v973, 2147483648
          %v1017 = vsel %vm1015, %v1016, %v1014
          %v1018 = vrsqrt.pop %v974
          %v1019 = vmul.f32 %v974, %v1018
          %vm1020 = vcmp.eq.f32.partialorder %v974, inf
          %v1021 = vsel %vm1020, %v974, %v1019
          %vm1022 = vcmp.eq.f32.partialorder %v974, 0.0
          %v1023 = vand.u32 %v974, 2147483648
          %v1024 = vsel %vm1022, %v1023, %v1021
          %v1025 = vrsqrt.pop %v975
          %v1026 = vmul.f32 %v975, %v1025
          %vm1027 = vcmp.eq.f32.partialorder %v975, inf
          %v1028 = vsel %vm1027, %v975, %v1026
          %vm1029 = vcmp.eq.f32.partialorder %v975, 0.0
          %v1030 = vand.u32 %v975, 2147483648
          %v1031 = vsel %vm1029, %v1030, %v1028
          %v1032 = vadd.f32 %v982, %v989
          %v1033 = vadd.f32 %v1032, %v996
          %v1034 = vadd.f32 %v1033, %v1003
          %v1035 = vadd.f32 %v1034, %v1010
          %v1036 = vadd.f32 %v1035, %v1017
          %v1037 = vadd.f32 %v1036, %v1024
          %v1038 = vadd.f32 %v1037, %v1031
          %v1039 = vrot.slane %v1038, 4
          %v1040 = vadd.f32 %v1038, %v1039
          %v1041 = vrot.slane %v1040, 2
          %v1042 = vadd.f32 %v1040, %v1041
          %v1043 = vrot.slane %v1042, 1
          %v1044 = vadd.f32 %v1042, %v1043
          %v1045 = vmul.f32 %v1044, 0.015625
          %1046 = vst [vmem:[%s411] sm:$0x1] %v1045
        $region88: #{moco_forward.2} parent=55 // pred_fallthru
          _
        %p1047 = scmp.lt.s32.totalorder %s27, 7
        %s1048 = scalar_select %p1047, %s27, 7
        %s1049 = scalar_lea.vmem %s9, %s1048
        // Predicated region
        $region89: #{moco_forward.2} parent=55 // pred_check
          %p1050 = pneg %p249
        $region90: #{moco_forward.2} parent=55 // pred_check_branch
          %1052 = sbr.rel (%p1050) target = $region92
        $region91: #{moco_forward.2} parent=55 // pred_region
          _
        $region92: #{moco_forward.2} parent=55 // pred_fallthru
          _
      $region56: #{moco_forward.2} parent=5 // pred_fallthru
        _
      %p1053 = scmp.le.s32.totalorder 2, %s18
      // Predicated region
      $region93: #{moco_forward.2} parent=5 // pred_check
        %p1054 = pneg %p1053
      $region94: #{moco_forward.2} parent=5 // pred_check_branch
        %1056 = sbr.rel (%p1054) target = $region96
      $region95: #{moco_forward.2} parent=5 // pred_region
        %s1057 = ssub.s32 %s18, 2
        // Predicated region
        $region97: #{moco_forward.2} parent=95 // pred_check
          %p1058 = pneg %p255
        $region98: #{moco_forward.2} parent=95 // pred_check_branch
          %1060 = sbr.rel (%p1058) target = $region100
        $region99: #{moco_forward.2} parent=95 // pred_region
          %p1061 = scmp.lt.s32.totalorder %s29, 7
          %s1062 = scalar_select %p1061, %s29, 7
          %s1063 = scalar_lea.vmem %s9, %s1062
        $region100: #{moco_forward.2} parent=95 // pred_fallthru
          _
      $region96: #{moco_forward.2} parent=5 // pred_fallthru
        _
    $region6: #{moco_forward.2} parent=1 // loop_footer
      %s22 = sadd.s32 1, %s18
    $region7: #{moco_forward.2} parent=1 // loop_footer_branch
      %17 = sbr.rel target = $region3
    $region8: #{moco_forward.2} parent=1 // loop_exit
      _
    %1064 = vsyncpa [#allocation4], 1
    %s1065 = scalar_lea.sflag [#allocation4], 1
    %1066 = vsyncpa %s1065, 1
    %1067 = vsyncpa [#allocation6], 1
    %1068 = vsyncpa [#allocation9], 1

</llo_original>
